<compile_context>
chip_gen: v6e
topology: v6e:2x2x1
jax: 0.10.0
libtpu: 0.0.40
codegen_flags: <defaults>
</compile_context>

<pallas_src>
import math
import functools

import jax
import jax.numpy as jnp
import numpy as np
from jax.experimental import pallas as pl
from jax.experimental.pallas import tpu as pltpu


# ----------------------------------------------------------------------------
# Pallas kernels
# ----------------------------------------------------------------------------

def _bilstm_kernel(x_ref, w_ih_ref, w_hh_ref, b_ref, out_ref):
    """One LSTM layer, both directions. grid=(2,): d=0 forward, d=1 backward.

    x_ref:    [T, B, D]   layer input (shared by both directions)
    w_ih_ref: [D, 4H]     pre-transposed input weights for this direction
    w_hh_ref: [H, 4H]     pre-transposed recurrent weights for this direction
    b_ref:    [1, 4H]     b_ih + b_hh for this direction
    out_ref:  [T, B, H]   hidden states for this direction (original time order)
    """
    d = pl.program_id(0)
    reverse = d == 1
    T, B, D = x_ref.shape
    H = w_hh_ref.shape[0]

    # Hoisted input projection: one MXU-friendly GEMM instead of T tiny matmuls.
    x_flat = x_ref[...].reshape(T * B, D)
    gx = (jnp.dot(x_flat, w_ih_ref[...], preferred_element_type=jnp.float32)
          + b_ref[...]).reshape(T, B, 4 * H)

    w_hh = w_hh_ref[...]                           # [H, 4H], loaded once

    h = jnp.zeros((B, H), jnp.float32)
    c = jnp.zeros((B, H), jnp.float32)
    hs = []
    for t in range(T):                             # static unroll (T is small)
        # Backward direction consumes the sequence reversed; static slices + select.
        g_t = jnp.where(reverse, gx[T - 1 - t], gx[t])            # [B, 4H]
        gates = g_t + jnp.dot(h, w_hh, preferred_element_type=jnp.float32)
        i = jax.nn.sigmoid(gates[:, 0 * H:1 * H])
        f = jax.nn.sigmoid(gates[:, 1 * H:2 * H])
        g = jnp.tanh(gates[:, 2 * H:3 * H])
        o = jax.nn.sigmoid(gates[:, 3 * H:4 * H])
        c = f * c + i * g
        h = o * jnp.tanh(c)
        hs.append(h)

    # Put results back into original time order (static selects, single writeback).
    rows = [jnp.where(reverse, hs[T - 1 - t], hs[t]) for t in range(T)]
    out_ref[...] = jnp.stack(rows, axis=0).astype(out_ref.dtype)


def _mha_fused_kernel(x_ref, in_w_ref, in_b_ref, out_w_ref, out_b_ref, mask_ref,
                      o_ref, *, num_heads):
    """Fused multi-head self-attention: qkv proj + attention + out proj, one block.

    x_ref:     [T, B, E]
    in_w_ref:  [E, 3E]  (pre-transposed in_proj weight)
    in_b_ref:  [1, 3E]
    out_w_ref: [E, E]   (pre-transposed out_proj weight)
    out_b_ref: [1, E]
    mask_ref:  [B, T]   additive key-padding mask (0 / -inf)
    o_ref:     [T, B, E]
    """
    T, B, E = x_ref.shape
    nH = num_heads
    hd = E // nH
    scale = 1.0 / math.sqrt(hd)

    x = x_ref[...].reshape(T * B, E)
    qkv = (jnp.dot(x, in_w_ref[...], preferred_element_type=jnp.float32)
           + in_b_ref[...]).reshape(T, B, 3 * E)

    out_w = out_w_ref[...]
    out_b = out_b_ref[...]

    for b in range(B):                             # static unroll (small B, nH)
        qkv_b = qkv[:, b, :]                       # [T, 3E]
        mask_b = mask_ref[b:b + 1, :]              # [1, T] additive key mask
        head_ctx = []
        for h in range(nH):
            q = qkv_b[:, 0 * E + h * hd:0 * E + (h + 1) * hd]    # [T, hd]
            k = qkv_b[:, 1 * E + h * hd:1 * E + (h + 1) * hd]
            v = qkv_b[:, 2 * E + h * hd:2 * E + (h + 1) * hd]
            s = jnp.dot(q, k.T, preferred_element_type=jnp.float32) * scale  # [T, T]
            s = s + mask_b
            s = s - jnp.max(s, axis=-1, keepdims=True)
            p = jnp.exp(s)
            p = p * pl.reciprocal(jnp.sum(p, axis=-1, keepdims=True), approx=True)
            head_ctx.append(jnp.dot(p, v, preferred_element_type=jnp.float32))  # [T, hd]
        ctx_b = jnp.concatenate(head_ctx, axis=-1)                # [T, E]
        out_rows = (jnp.dot(ctx_b, out_w, preferred_element_type=jnp.float32)
                    + out_b)                                      # [T, E]
        o_ref[:, b:b + 1, :] = out_rows[:, None, :].astype(o_ref.dtype)


# ----------------------------------------------------------------------------
# Wrappers
# ----------------------------------------------------------------------------

def _run_bilstm_layer(x, w_ih_t, w_hh_t, b):
    """x: [T,B,D]; w_ih_t: [2,D,4H]; w_hh_t: [2,H,4H]; b: [2,1,4H] → [2,T,B,H]."""
    T, B, D = x.shape
    H = w_hh_t.shape[1]
    return pl.pallas_call(
        _bilstm_kernel,
        out_shape=jax.ShapeDtypeStruct((2, T, B, H), jnp.float32),
        grid_spec=pltpu.PrefetchScalarGridSpec(
            num_scalar_prefetch=0,
            grid=(2,),
            in_specs=[
                pl.BlockSpec((T, B, D), lambda d: (0, 0, 0)),
                pl.BlockSpec((None, D, 4 * H), lambda d: (d, 0, 0)),
                pl.BlockSpec((None, H, 4 * H), lambda d: (d, 0, 0)),
                pl.BlockSpec((None, 1, 4 * H), lambda d: (d, 0, 0)),
            ],
            out_specs=pl.BlockSpec((None, T, B, H), lambda d: (d, 0, 0, 0)),
        ),
        compiler_params=pltpu.CompilerParams(dimension_semantics=("parallel",)),
    )(x, w_ih_t, w_hh_t, b)


def _pallas_mha(x, in_w_t, in_b, out_w_t, out_b, mask_add, *, num_heads):
    T, B, E = x.shape
    kernel = functools.partial(_mha_fused_kernel, num_heads=num_heads)
    return pl.pallas_call(
        kernel,
        out_shape=jax.ShapeDtypeStruct((T, B, E), jnp.float32),
    )(x, in_w_t, in_b, out_w_t, out_b, mask_add)


# ----------------------------------------------------------------------------
# Model: parameter init (PyTorch layout) + host-side prep + forward
# ----------------------------------------------------------------------------

def init_params(key, input_dim, hidden, layers, attn_heads):
    params = {"lstm": []}
    k = 1.0 / math.sqrt(hidden)
    E = 2 * hidden
    for layer in range(layers):
        d_in = input_dim if layer == 0 else 2 * hidden
        layer_p = {}
        for direction in ("fwd", "bwd"):
            key, k1, k2, k3, k4 = jax.random.split(key, 5)
            layer_p[direction] = {
                "w_ih": jax.random.uniform(k1, (4 * hidden, d_in), jnp.float32, -k, k),
                "w_hh": jax.random.uniform(k2, (4 * hidden, hidden), jnp.float32, -k, k),
                # PyTorch keeps b_ih and b_hh separately; forward only uses their sum.
                "b": (jax.random.uniform(k3, (4 * hidden,), jnp.float32, -k, k)
                      + jax.random.uniform(k4, (4 * hidden,), jnp.float32, -k, k)),
            }
        params["lstm"].append(layer_p)
    if attn_heads:
        key, k1, k2 = jax.random.split(key, 3)
        bound = math.sqrt(6.0 / (E + E))  # xavier_uniform-like, deterministic
        params["attn"] = {
            "in_proj_w": jax.random.uniform(k1, (3 * E, E), jnp.float32, -bound, bound),
            "in_proj_b": jnp.zeros((3 * E,), jnp.float32),
            "out_proj_w": jax.random.uniform(k2, (E, E), jnp.float32, -bound, bound),
            "out_proj_b": jnp.zeros((E,), jnp.float32),
        }
    return params


def prepare_params(params):
    """One-time host-side prep: pre-transpose weights, stack directions."""
    prepared = {"lstm": []}
    for lp in params["lstm"]:
        f, b = lp["fwd"], lp["bwd"]
        prepared["lstm"].append({
            "w_ih_t": jnp.stack([f["w_ih"].T, b["w_ih"].T]),     # [2, D, 4H]
            "w_hh_t": jnp.stack([f["w_hh"].T, b["w_hh"].T]),     # [2, H, 4H]
            "b": jnp.stack([f["b"], b["b"]])[:, None, :],        # [2, 1, 4H]
        })
    if "attn" in params:
        ap = params["attn"]
        E = ap["out_proj_w"].shape[0]
        prepared["attn"] = {
            "in_w_t": ap["in_proj_w"].T,                          # [E, 3E]
            "in_b": ap["in_proj_b"].reshape(1, 3 * E),
            "out_w_t": ap["out_proj_w"].T,                        # [E, E]
            "out_b": ap["out_proj_b"].reshape(1, E),
        }
    return prepared


def lstm_attn_forward(words, word_features, prepared, *, attn_heads, word_pad_idx):
    # --- bidirectional multi-layer LSTM --------------------------------------
    x = word_features.astype(jnp.float32)          # [T, B, D]
    for lp in prepared["lstm"]:
        both = _run_bilstm_layer(x, lp["w_ih_t"], lp["w_hh_t"], lp["b"])   # [2,T,B,H]
        x = jnp.concatenate([both[0], both[1]], axis=-1)                   # [T,B,2H]
    lstm_out = x

    if not attn_heads:
        return lstm_out

    # --- fused multi-head self-attention with key_padding_mask ----------------
    ap = prepared["attn"]
    key_padding_mask = (words == word_pad_idx).T                           # [B, T] bool
    # NOTE: a fully-padded sequence yields a NaN softmax row (matches PyTorch).
    mask_add = jnp.where(key_padding_mask, -jnp.inf, 0.0).astype(jnp.float32)
    return _pallas_mha(lstm_out, ap["in_w_t"], ap["in_b"], ap["out_w_t"],
                       ap["out_b"], mask_add, num_heads=attn_heads)


# ----------------------------------------------------------------------------
# Pure-JAX reference (for correctness check), uses PyTorch-layout params
# ----------------------------------------------------------------------------

def _ref_lstm_dir(x, w_ih, w_hh, b):
    H = w_hh.shape[1]
    B = x.shape[1]

    def step(carry, xt):
        h, c = carry
        g = xt @ w_ih.T + h @ w_hh.T + b
        i, f, gg, o = jnp.split(g, 4, axis=-1)
        c = jax.nn.sigmoid(f) * c + jax.nn.sigmoid(i) * jnp.tanh(gg)
        h = jax.nn.sigmoid(o) * jnp.tanh(c)
        return (h, c), h

    init = (jnp.zeros((B, H), jnp.float32), jnp.zeros((B, H), jnp.float32))
    _, hs = jax.lax.scan(step, init, x)
    return hs


def _ref_forward(words, word_features, params, *, attn_heads, word_pad_idx):
    x = word_features.astype(jnp.float32)
    for lp in params["lstm"]:
        hf = _ref_lstm_dir(x, lp["fwd"]["w_ih"], lp["fwd"]["w_hh"], lp["fwd"]["b"])
        hb = _ref_lstm_dir(x[::-1], lp["bwd"]["w_ih"], lp["bwd"]["w_hh"], lp["bwd"]["b"])[::-1]
        x = jnp.concatenate([hf, hb], axis=-1)
    if not attn_heads:
        return x
    T, B, E = x.shape
    nH, hd = attn_heads, E // attn_heads
    ap = params["attn"]
    qkv = x.reshape(T * B, E) @ ap["in_proj_w"].T + ap["in_proj_b"]
    q, k, v = jnp.split(qkv, 3, axis=-1)
    q, k, v = [a.reshape(T, B, nH, hd).transpose(1, 2, 0, 3) for a in (q, k, v)]
    s = jnp.einsum("bhqd,bhkd->bhqk", q, k) / math.sqrt(hd)
    mask = (words == word_pad_idx).T[:, None, None, :]
    s = jnp.where(mask, -jnp.inf, s)
    p = jax.nn.softmax(s, axis=-1)
    o = jnp.einsum("bhqk,bhkd->bhqd", p, v)
    o = o.transpose(2, 0, 1, 3).reshape(T * B, E)
    return (o @ ap["out_proj_w"].T + ap["out_proj_b"]).reshape(T, B, E)


# ----------------------------------------------------------------------------
# Main
# ----------------------------------------------------------------------------

if __name__ == "__main__":
    INPUT_DIM = 16
    HIDDEN = 16
    LAYERS = 2
    HEADS = 2
    PAD_IDX = 0
    T, B = 8, 2

    key = jax.random.PRNGKey(0)
    key, kp, kw, kf = jax.random.split(key, 4)

    params = init_params(kp, INPUT_DIM, HIDDEN, LAYERS, HEADS)
    prepared = prepare_params(params)

    words = jax.random.randint(kw, (T, B), 1, 50, dtype=jnp.int32)
    words = words.at[T - 2:, 1].set(PAD_IDX)        # pad tail of second sequence
    word_features = jax.random.normal(kf, (T, B, INPUT_DIM), jnp.float32)

    fwd = functools.partial(lstm_attn_forward, attn_heads=HEADS, word_pad_idx=PAD_IDX)
    out = jax.block_until_ready(fwd(words, word_features, prepared))

    ref = jax.block_until_ready(
        _ref_forward(words, word_features, params, attn_heads=HEADS,
                     word_pad_idx=PAD_IDX))

    assert out.shape == (T, B, 2 * HIDDEN), out.shape
    # Tolerance relaxed slightly vs. exact f32 because the softmax denominator uses the
    # EUP approximate reciprocal (pl.reciprocal(..., approx=True)).
    np.testing.assert_allclose(np.asarray(out), np.asarray(ref), atol=2e-3, rtol=2e-3)
    print("KERNEL_OK")
</pallas_src>

<mosaic_0001>
module attributes {stable_mosaic.version = 11 : i64} {
  func.func @_bilstm_kernel(%arg0: i32, %arg1: memref<8x2x16xf32, #tpu.memory_space<vmem>>, %arg2: memref<1x16x64xf32, #tpu.memory_space<vmem>>, %arg3: memref<1x16x64xf32, #tpu.memory_space<vmem>>, %arg4: memref<1x1x64xf32, #tpu.memory_space<vmem>>, %arg5: memref<1x8x2x16xf32, #tpu.memory_space<vmem>>) attributes {dimension_semantics = [#tpu.dimension_semantics<parallel>], iteration_bounds = array<i64: 2>, scalar_prefetch = 0 : i64, scratch_operands = 0 : i64, tpu.core_type = #tpu.core_type<tc>, window_params = [{pipeline_mode = #tpu.pipeline_mode<synchronous>, transform_indices = @transform_0, window_bounds = array<i64: 8, 2, 16>}, {transform_indices = @transform_1, window_bounds = array<i64: 1, 16, 64>}, {transform_indices = @transform_2, window_bounds = array<i64: 1, 16, 64>}, {transform_indices = @transform_3, window_bounds = array<i64: 1, 1, 64>}, {transform_indices = @transform_4, window_bounds = array<i64: 1, 8, 2, 16>}]} {
    %c1_i32 = arith.constant 1 : i32
    %0 = arith.cmpi eq, %arg0, %c1_i32 : i32
    %c0 = arith.constant 0 : index
    %c0_0 = arith.constant 0 : index
    %c0_1 = arith.constant 0 : index
    %1 = vector.load %arg1[%c0, %c0_0, %c0_1] : memref<8x2x16xf32, #tpu.memory_space<vmem>>, vector<8x2x16xf32>
    %2 = vector.shape_cast %1 : vector<8x2x16xf32> to vector<16x16xf32>
    %c0_2 = arith.constant 0 : index
    %c0_3 = arith.constant 0 : index
    %c0_4 = arith.constant 0 : index
    %3 = vector.load %arg2[%c0_2, %c0_3, %c0_4] : memref<1x16x64xf32, #tpu.memory_space<vmem>>, vector<1x16x64xf32>
    %4 = vector.shape_cast %3 : vector<1x16x64xf32> to vector<16x64xf32>
    %cst = arith.constant dense<0.000000e+00> : vector<16x64xf32>
    %5 = tpu.matmul %2, %4, %cst {dimension_numbers = #tpu.dot_dimension_numbers<[1], [0], [0], [1], [0, 0, 1, 1], [], []>} : vector<16x16xf32>, vector<16x64xf32>, vector<16x64xf32> -> vector<16x64xf32>
    %c0_5 = arith.constant 0 : index
    %c0_6 = arith.constant 0 : index
    %c0_7 = arith.constant 0 : index
    %6 = vector.load %arg4[%c0_5, %c0_6, %c0_7] : memref<1x1x64xf32, #tpu.memory_space<vmem>>, vector<1x1x64xf32>
    %7 = vector.shape_cast %6 : vector<1x1x64xf32> to vector<1x64xf32>
    %8 = vector.broadcast %7 : vector<1x64xf32> to vector<16x64xf32>
    %9 = arith.addf %5, %8 : vector<16x64xf32>
    %10 = vector.shape_cast %9 : vector<16x64xf32> to vector<8x2x64xf32>
    %c0_8 = arith.constant 0 : index
    %c0_9 = arith.constant 0 : index
    %c0_10 = arith.constant 0 : index
    %11 = vector.load %arg3[%c0_8, %c0_9, %c0_10] : memref<1x16x64xf32, #tpu.memory_space<vmem>>, vector<1x16x64xf32>
    %12 = vector.shape_cast %11 : vector<1x16x64xf32> to vector<16x64xf32>
    %cst_11 = arith.constant 0.000000e+00 : f32
    %13 = vector.broadcast %cst_11 : f32 to vector<2x16xf32>
    %cst_12 = arith.constant 0.000000e+00 : f32
    %14 = vector.broadcast %cst_12 : f32 to vector<2x16xf32>
    %15 = vector.extract_strided_slice %10 {offsets = [7, 0, 0], sizes = [1, 2, 64], strides = [1, 1, 1]} : vector<8x2x64xf32> to vector<1x2x64xf32>
    %16 = vector.shape_cast %15 : vector<1x2x64xf32> to vector<2x64xf32>
    %17 = vector.extract_strided_slice %10 {offsets = [0, 0, 0], sizes = [1, 2, 64], strides = [1, 1, 1]} : vector<8x2x64xf32> to vector<1x2x64xf32>
    %18 = vector.shape_cast %17 : vector<1x2x64xf32> to vector<2x64xf32>
    %19 = arith.select %0, %16, %18 : vector<2x64xf32>
    %cst_13 = arith.constant dense<0.000000e+00> : vector<2x64xf32>
    %20 = tpu.matmul %13, %12, %cst_13 {dimension_numbers = #tpu.dot_dimension_numbers<[1], [0], [0], [1], [0, 0, 1, 1], [], []>} : vector<2x16xf32>, vector<16x64xf32>, vector<2x64xf32> -> vector<2x64xf32>
    %21 = arith.addf %19, %20 : vector<2x64xf32>
    %22 = vector.extract_strided_slice %21 {offsets = [0, 0], sizes = [2, 16], strides = [1, 1]} : vector<2x64xf32> to vector<2x16xf32>
    %23 = arith.negf %22 : vector<2x16xf32>
    %24 = math.exp %23 : vector<2x16xf32>
    %cst_14 = arith.constant 1.000000e+00 : f32
    %25 = vector.broadcast %cst_14 : f32 to vector<2x16xf32>
    %26 = arith.addf %25, %24 : vector<2x16xf32>
    %27 = arith.divf %25, %26 : vector<2x16xf32>
    %28 = vector.extract_strided_slice %21 {offsets = [0, 16], sizes = [2, 16], strides = [1, 1]} : vector<2x64xf32> to vector<2x16xf32>
    %29 = arith.negf %28 : vector<2x16xf32>
    %30 = math.exp %29 : vector<2x16xf32>
    %cst_15 = arith.constant 1.000000e+00 : f32
    %31 = vector.broadcast %cst_15 : f32 to vector<2x16xf32>
    %32 = arith.addf %31, %30 : vector<2x16xf32>
    %33 = arith.divf %31, %32 : vector<2x16xf32>
    %34 = vector.extract_strided_slice %21 {offsets = [0, 32], sizes = [2, 16], strides = [1, 1]} : vector<2x64xf32> to vector<2x16xf32>
    %35 = math.tanh %34 : vector<2x16xf32>
    %36 = vector.extract_strided_slice %21 {offsets = [0, 48], sizes = [2, 16], strides = [1, 1]} : vector<2x64xf32> to vector<2x16xf32>
    %37 = arith.negf %36 : vector<2x16xf32>
    %38 = math.exp %37 : vector<2x16xf32>
    %cst_16 = arith.constant 1.000000e+00 : f32
    %39 = vector.broadcast %cst_16 : f32 to vector<2x16xf32>
    %40 = arith.addf %39, %38 : vector<2x16xf32>
    %41 = arith.divf %39, %40 : vector<2x16xf32>
    %42 = arith.mulf %33, %14 : vector<2x16xf32>
    %43 = arith.mulf %27, %35 : vector<2x16xf32>
    %44 = arith.addf %42, %43 : vector<2x16xf32>
    %45 = math.tanh %44 : vector<2x16xf32>
    %46 = arith.mulf %41, %45 : vector<2x16xf32>
    %47 = vector.extract_strided_slice %10 {offsets = [6, 0, 0], sizes = [1, 2, 64], strides = [1, 1, 1]} : vector<8x2x64xf32> to vector<1x2x64xf32>
    %48 = vector.shape_cast %47 : vector<1x2x64xf32> to vector<2x64xf32>
    %49 = vector.extract_strided_slice %10 {offsets = [1, 0, 0], sizes = [1, 2, 64], strides = [1, 1, 1]} : vector<8x2x64xf32> to vector<1x2x64xf32>
    %50 = vector.shape_cast %49 : vector<1x2x64xf32> to vector<2x64xf32>
    %51 = arith.select %0, %48, %50 : vector<2x64xf32>
    %cst_17 = arith.constant dense<0.000000e+00> : vector<2x64xf32>
    %52 = tpu.matmul %46, %12, %cst_17 {dimension_numbers = #tpu.dot_dimension_numbers<[1], [0], [0], [1], [0, 0, 1, 1], [], []>} : vector<2x16xf32>, vector<16x64xf32>, vector<2x64xf32> -> vector<2x64xf32>
    %53 = arith.addf %51, %52 : vector<2x64xf32>
    %54 = vector.extract_strided_slice %53 {offsets = [0, 0], sizes = [2, 16], strides = [1, 1]} : vector<2x64xf32> to vector<2x16xf32>
    %55 = arith.negf %54 : vector<2x16xf32>
    %56 = math.exp %55 : vector<2x16xf32>
    %cst_18 = arith.constant 1.000000e+00 : f32
    %57 = vector.broadcast %cst_18 : f32 to vector<2x16xf32>
    %58 = arith.addf %57, %56 : vector<2x16xf32>
    %59 = arith.divf %57, %58 : vector<2x16xf32>
    %60 = vector.extract_strided_slice %53 {offsets = [0, 16], sizes = [2, 16], strides = [1, 1]} : vector<2x64xf32> to vector<2x16xf32>
    %61 = arith.negf %60 : vector<2x16xf32>
    %62 = math.exp %61 : vector<2x16xf32>
    %cst_19 = arith.constant 1.000000e+00 : f32
    %63 = vector.broadcast %cst_19 : f32 to vector<2x16xf32>
    %64 = arith.addf %63, %62 : vector<2x16xf32>
    %65 = arith.divf %63, %64 : vector<2x16xf32>
    %66 = vector.extract_strided_slice %53 {offsets = [0, 32], sizes = [2, 16], strides = [1, 1]} : vector<2x64xf32> to vector<2x16xf32>
    %67 = math.tanh %66 : vector<2x16xf32>
    %68 = vector.extract_strided_slice %53 {offsets = [0, 48], sizes = [2, 16], strides = [1, 1]} : vector<2x64xf32> to vector<2x16xf32>
    %69 = arith.negf %68 : vector<2x16xf32>
    %70 = math.exp %69 : vector<2x16xf32>
    %cst_20 = arith.constant 1.000000e+00 : f32
    %71 = vector.broadcast %cst_20 : f32 to vector<2x16xf32>
    %72 = arith.addf %71, %70 : vector<2x16xf32>
    %73 = arith.divf %71, %72 : vector<2x16xf32>
    %74 = arith.mulf %65, %44 : vector<2x16xf32>
    %75 = arith.mulf %59, %67 : vector<2x16xf32>
    %76 = arith.addf %74, %75 : vector<2x16xf32>
    %77 = math.tanh %76 : vector<2x16xf32>
    %78 = arith.mulf %73, %77 : vector<2x16xf32>
    %79 = vector.extract_strided_slice %10 {offsets = [5, 0, 0], sizes = [1, 2, 64], strides = [1, 1, 1]} : vector<8x2x64xf32> to vector<1x2x64xf32>
    %80 = vector.shape_cast %79 : vector<1x2x64xf32> to vector<2x64xf32>
    %81 = vector.extract_strided_slice %10 {offsets = [2, 0, 0], sizes = [1, 2, 64], strides = [1, 1, 1]} : vector<8x2x64xf32> to vector<1x2x64xf32>
    %82 = vector.shape_cast %81 : vector<1x2x64xf32> to vector<2x64xf32>
    %83 = arith.select %0, %80, %82 : vector<2x64xf32>
    %cst_21 = arith.constant dense<0.000000e+00> : vector<2x64xf32>
    %84 = tpu.matmul %78, %12, %cst_21 {dimension_numbers = #tpu.dot_dimension_numbers<[1], [0], [0], [1], [0, 0, 1, 1], [], []>} : vector<2x16xf32>, vector<16x64xf32>, vector<2x64xf32> -> vector<2x64xf32>
    %85 = arith.addf %83, %84 : vector<2x64xf32>
    %86 = vector.extract_strided_slice %85 {offsets = [0, 0], sizes = [2, 16], strides = [1, 1]} : vector<2x64xf32> to vector<2x16xf32>
    %87 = arith.negf %86 : vector<2x16xf32>
    %88 = math.exp %87 : vector<2x16xf32>
    %cst_22 = arith.constant 1.000000e+00 : f32
    %89 = vector.broadcast %cst_22 : f32 to vector<2x16xf32>
    %90 = arith.addf %89, %88 : vector<2x16xf32>
    %91 = arith.divf %89, %90 : vector<2x16xf32>
    %92 = vector.extract_strided_slice %85 {offsets = [0, 16], sizes = [2, 16], strides = [1, 1]} : vector<2x64xf32> to vector<2x16xf32>
    %93 = arith.negf %92 : vector<2x16xf32>
    %94 = math.exp %93 : vector<2x16xf32>
    %cst_23 = arith.constant 1.000000e+00 : f32
    %95 = vector.broadcast %cst_23 : f32 to vector<2x16xf32>
    %96 = arith.addf %95, %94 : vector<2x16xf32>
    %97 = arith.divf %95, %96 : vector<2x16xf32>
    %98 = vector.extract_strided_slice %85 {offsets = [0, 32], sizes = [2, 16], strides = [1, 1]} : vector<2x64xf32> to vector<2x16xf32>
    %99 = math.tanh %98 : vector<2x16xf32>
    %100 = vector.extract_strided_slice %85 {offsets = [0, 48], sizes = [2, 16], strides = [1, 1]} : vector<2x64xf32> to vector<2x16xf32>
    %101 = arith.negf %100 : vector<2x16xf32>
    %102 = math.exp %101 : vector<2x16xf32>
    %cst_24 = arith.constant 1.000000e+00 : f32
    %103 = vector.broadcast %cst_24 : f32 to vector<2x16xf32>
    %104 = arith.addf %103, %102 : vector<2x16xf32>
    %105 = arith.divf %103, %104 : vector<2x16xf32>
    %106 = arith.mulf %97, %76 : vector<2x16xf32>
    %107 = arith.mulf %91, %99 : vector<2x16xf32>
    %108 = arith.addf %106, %107 : vector<2x16xf32>
    %109 = math.tanh %108 : vector<2x16xf32>
    %110 = arith.mulf %105, %109 : vector<2x16xf32>
    %111 = vector.extract_strided_slice %10 {offsets = [4, 0, 0], sizes = [1, 2, 64], strides = [1, 1, 1]} : vector<8x2x64xf32> to vector<1x2x64xf32>
    %112 = vector.shape_cast %111 : vector<1x2x64xf32> to vector<2x64xf32>
    %113 = vector.extract_strided_slice %10 {offsets = [3, 0, 0], sizes = [1, 2, 64], strides = [1, 1, 1]} : vector<8x2x64xf32> to vector<1x2x64xf32>
    %114 = vector.shape_cast %113 : vector<1x2x64xf32> to vector<2x64xf32>
    %115 = arith.select %0, %112, %114 : vector<2x64xf32>
    %cst_25 = arith.constant dense<0.000000e+00> : vector<2x64xf32>
    %116 = tpu.matmul %110, %12, %cst_25 {dimension_numbers = #tpu.dot_dimension_numbers<[1], [0], [0], [1], [0, 0, 1, 1], [], []>} : vector<2x16xf32>, vector<16x64xf32>, vector<2x64xf32> -> vector<2x64xf32>
    %117 = arith.addf %115, %116 : vector<2x64xf32>
    %118 = vector.extract_strided_slice %117 {offsets = [0, 0], sizes = [2, 16], strides = [1, 1]} : vector<2x64xf32> to vector<2x16xf32>
    %119 = arith.negf %118 : vector<2x16xf32>
    %120 = math.exp %119 : vector<2x16xf32>
    %cst_26 = arith.constant 1.000000e+00 : f32
    %121 = vector.broadcast %cst_26 : f32 to vector<2x16xf32>
    %122 = arith.addf %121, %120 : vector<2x16xf32>
    %123 = arith.divf %121, %122 : vector<2x16xf32>
    %124 = vector.extract_strided_slice %117 {offsets = [0, 16], sizes = [2, 16], strides = [1, 1]} : vector<2x64xf32> to vector<2x16xf32>
    %125 = arith.negf %124 : vector<2x16xf32>
    %126 = math.exp %125 : vector<2x16xf32>
    %cst_27 = arith.constant 1.000000e+00 : f32
    %127 = vector.broadcast %cst_27 : f32 to vector<2x16xf32>
    %128 = arith.addf %127, %126 : vector<2x16xf32>
    %129 = arith.divf %127, %128 : vector<2x16xf32>
    %130 = vector.extract_strided_slice %117 {offsets = [0, 32], sizes = [2, 16], strides = [1, 1]} : vector<2x64xf32> to vector<2x16xf32>
    %131 = math.tanh %130 : vector<2x16xf32>
    %132 = vector.extract_strided_slice %117 {offsets = [0, 48], sizes = [2, 16], strides = [1, 1]} : vector<2x64xf32> to vector<2x16xf32>
    %133 = arith.negf %132 : vector<2x16xf32>
    %134 = math.exp %133 : vector<2x16xf32>
    %cst_28 = arith.constant 1.000000e+00 : f32
    %135 = vector.broadcast %cst_28 : f32 to vector<2x16xf32>
    %136 = arith.addf %135, %134 : vector<2x16xf32>
    %137 = arith.divf %135, %136 : vector<2x16xf32>
    %138 = arith.mulf %129, %108 : vector<2x16xf32>
    %139 = arith.mulf %123, %131 : vector<2x16xf32>
    %140 = arith.addf %138, %139 : vector<2x16xf32>
    %141 = math.tanh %140 : vector<2x16xf32>
    %142 = arith.mulf %137, %141 : vector<2x16xf32>
    %143 = vector.extract_strided_slice %10 {offsets = [3, 0, 0], sizes = [1, 2, 64], strides = [1, 1, 1]} : vector<8x2x64xf32> to vector<1x2x64xf32>
    %144 = vector.shape_cast %143 : vector<1x2x64xf32> to vector<2x64xf32>
    %145 = vector.extract_strided_slice %10 {offsets = [4, 0, 0], sizes = [1, 2, 64], strides = [1, 1, 1]} : vector<8x2x64xf32> to vector<1x2x64xf32>
    %146 = vector.shape_cast %145 : vector<1x2x64xf32> to vector<2x64xf32>
    %147 = arith.select %0, %144, %146 : vector<2x64xf32>
    %cst_29 = arith.constant dense<0.000000e+00> : vector<2x64xf32>
    %148 = tpu.matmul %142, %12, %cst_29 {dimension_numbers = #tpu.dot_dimension_numbers<[1], [0], [0], [1], [0, 0, 1, 1], [], []>} : vector<2x16xf32>, vector<16x64xf32>, vector<2x64xf32> -> vector<2x64xf32>
    %149 = arith.addf %147, %148 : vector<2x64xf32>
    %150 = vector.extract_strided_slice %149 {offsets = [0, 0], sizes = [2, 16], strides = [1, 1]} : vector<2x64xf32> to vector<2x16xf32>
    %151 = arith.negf %150 : vector<2x16xf32>
    %152 = math.exp %151 : vector<2x16xf32>
    %cst_30 = arith.constant 1.000000e+00 : f32
    %153 = vector.broadcast %cst_30 : f32 to vector<2x16xf32>
    %154 = arith.addf %153, %152 : vector<2x16xf32>
    %155 = arith.divf %153, %154 : vector<2x16xf32>
    %156 = vector.extract_strided_slice %149 {offsets = [0, 16], sizes = [2, 16], strides = [1, 1]} : vector<2x64xf32> to vector<2x16xf32>
    %157 = arith.negf %156 : vector<2x16xf32>
    %158 = math.exp %157 : vector<2x16xf32>
    %cst_31 = arith.constant 1.000000e+00 : f32
    %159 = vector.broadcast %cst_31 : f32 to vector<2x16xf32>
    %160 = arith.addf %159, %158 : vector<2x16xf32>
    %161 = arith.divf %159, %160 : vector<2x16xf32>
    %162 = vector.extract_strided_slice %149 {offsets = [0, 32], sizes = [2, 16], strides = [1, 1]} : vector<2x64xf32> to vector<2x16xf32>
    %163 = math.tanh %162 : vector<2x16xf32>
    %164 = vector.extract_strided_slice %149 {offsets = [0, 48], sizes = [2, 16], strides = [1, 1]} : vector<2x64xf32> to vector<2x16xf32>
    %165 = arith.negf %164 : vector<2x16xf32>
    %166 = math.exp %165 : vector<2x16xf32>
    %cst_32 = arith.constant 1.000000e+00 : f32
    %167 = vector.broadcast %cst_32 : f32 to vector<2x16xf32>
    %168 = arith.addf %167, %166 : vector<2x16xf32>
    %169 = arith.divf %167, %168 : vector<2x16xf32>
    %170 = arith.mulf %161, %140 : vector<2x16xf32>
    %171 = arith.mulf %155, %163 : vector<2x16xf32>
    %172 = arith.addf %170, %171 : vector<2x16xf32>
    %173 = math.tanh %172 : vector<2x16xf32>
    %174 = arith.mulf %169, %173 : vector<2x16xf32>
    %175 = vector.extract_strided_slice %10 {offsets = [2, 0, 0], sizes = [1, 2, 64], strides = [1, 1, 1]} : vector<8x2x64xf32> to vector<1x2x64xf32>
    %176 = vector.shape_cast %175 : vector<1x2x64xf32> to vector<2x64xf32>
    %177 = vector.extract_strided_slice %10 {offsets = [5, 0, 0], sizes = [1, 2, 64], strides = [1, 1, 1]} : vector<8x2x64xf32> to vector<1x2x64xf32>
    %178 = vector.shape_cast %177 : vector<1x2x64xf32> to vector<2x64xf32>
    %179 = arith.select %0, %176, %178 : vector<2x64xf32>
    %cst_33 = arith.constant dense<0.000000e+00> : vector<2x64xf32>
    %180 = tpu.matmul %174, %12, %cst_33 {dimension_numbers = #tpu.dot_dimension_numbers<[1], [0], [0], [1], [0, 0, 1, 1], [], []>} : vector<2x16xf32>, vector<16x64xf32>, vector<2x64xf32> -> vector<2x64xf32>
    %181 = arith.addf %179, %180 : vector<2x64xf32>
    %182 = vector.extract_strided_slice %181 {offsets = [0, 0], sizes = [2, 16], strides = [1, 1]} : vector<2x64xf32> to vector<2x16xf32>
    %183 = arith.negf %182 : vector<2x16xf32>
    %184 = math.exp %183 : vector<2x16xf32>
    %cst_34 = arith.constant 1.000000e+00 : f32
    %185 = vector.broadcast %cst_34 : f32 to vector<2x16xf32>
    %186 = arith.addf %185, %184 : vector<2x16xf32>
    %187 = arith.divf %185, %186 : vector<2x16xf32>
    %188 = vector.extract_strided_slice %181 {offsets = [0, 16], sizes = [2, 16], strides = [1, 1]} : vector<2x64xf32> to vector<2x16xf32>
    %189 = arith.negf %188 : vector<2x16xf32>
    %190 = math.exp %189 : vector<2x16xf32>
    %cst_35 = arith.constant 1.000000e+00 : f32
    %191 = vector.broadcast %cst_35 : f32 to vector<2x16xf32>
    %192 = arith.addf %191, %190 : vector<2x16xf32>
    %193 = arith.divf %191, %192 : vector<2x16xf32>
    %194 = vector.extract_strided_slice %181 {offsets = [0, 32], sizes = [2, 16], strides = [1, 1]} : vector<2x64xf32> to vector<2x16xf32>
    %195 = math.tanh %194 : vector<2x16xf32>
    %196 = vector.extract_strided_slice %181 {offsets = [0, 48], sizes = [2, 16], strides = [1, 1]} : vector<2x64xf32> to vector<2x16xf32>
    %197 = arith.negf %196 : vector<2x16xf32>
    %198 = math.exp %197 : vector<2x16xf32>
    %cst_36 = arith.constant 1.000000e+00 : f32
    %199 = vector.broadcast %cst_36 : f32 to vector<2x16xf32>
    %200 = arith.addf %199, %198 : vector<2x16xf32>
    %201 = arith.divf %199, %200 : vector<2x16xf32>
    %202 = arith.mulf %193, %172 : vector<2x16xf32>
    %203 = arith.mulf %187, %195 : vector<2x16xf32>
    %204 = arith.addf %202, %203 : vector<2x16xf32>
    %205 = math.tanh %204 : vector<2x16xf32>
    %206 = arith.mulf %201, %205 : vector<2x16xf32>
    %207 = vector.extract_strided_slice %10 {offsets = [1, 0, 0], sizes = [1, 2, 64], strides = [1, 1, 1]} : vector<8x2x64xf32> to vector<1x2x64xf32>
    %208 = vector.shape_cast %207 : vector<1x2x64xf32> to vector<2x64xf32>
    %209 = vector.extract_strided_slice %10 {offsets = [6, 0, 0], sizes = [1, 2, 64], strides = [1, 1, 1]} : vector<8x2x64xf32> to vector<1x2x64xf32>
    %210 = vector.shape_cast %209 : vector<1x2x64xf32> to vector<2x64xf32>
    %211 = arith.select %0, %208, %210 : vector<2x64xf32>
    %cst_37 = arith.constant dense<0.000000e+00> : vector<2x64xf32>
    %212 = tpu.matmul %206, %12, %cst_37 {dimension_numbers = #tpu.dot_dimension_numbers<[1], [0], [0], [1], [0, 0, 1, 1], [], []>} : vector<2x16xf32>, vector<16x64xf32>, vector<2x64xf32> -> vector<2x64xf32>
    %213 = arith.addf %211, %212 : vector<2x64xf32>
    %214 = vector.extract_strided_slice %213 {offsets = [0, 0], sizes = [2, 16], strides = [1, 1]} : vector<2x64xf32> to vector<2x16xf32>
    %215 = arith.negf %214 : vector<2x16xf32>
    %216 = math.exp %215 : vector<2x16xf32>
    %cst_38 = arith.constant 1.000000e+00 : f32
    %217 = vector.broadcast %cst_38 : f32 to vector<2x16xf32>
    %218 = arith.addf %217, %216 : vector<2x16xf32>
    %219 = arith.divf %217, %218 : vector<2x16xf32>
    %220 = vector.extract_strided_slice %213 {offsets = [0, 16], sizes = [2, 16], strides = [1, 1]} : vector<2x64xf32> to vector<2x16xf32>
    %221 = arith.negf %220 : vector<2x16xf32>
    %222 = math.exp %221 : vector<2x16xf32>
    %cst_39 = arith.constant 1.000000e+00 : f32
    %223 = vector.broadcast %cst_39 : f32 to vector<2x16xf32>
    %224 = arith.addf %223, %222 : vector<2x16xf32>
    %225 = arith.divf %223, %224 : vector<2x16xf32>
    %226 = vector.extract_strided_slice %213 {offsets = [0, 32], sizes = [2, 16], strides = [1, 1]} : vector<2x64xf32> to vector<2x16xf32>
    %227 = math.tanh %226 : vector<2x16xf32>
    %228 = vector.extract_strided_slice %213 {offsets = [0, 48], sizes = [2, 16], strides = [1, 1]} : vector<2x64xf32> to vector<2x16xf32>
    %229 = arith.negf %228 : vector<2x16xf32>
    %230 = math.exp %229 : vector<2x16xf32>
    %cst_40 = arith.constant 1.000000e+00 : f32
    %231 = vector.broadcast %cst_40 : f32 to vector<2x16xf32>
    %232 = arith.addf %231, %230 : vector<2x16xf32>
    %233 = arith.divf %231, %232 : vector<2x16xf32>
    %234 = arith.mulf %225, %204 : vector<2x16xf32>
    %235 = arith.mulf %219, %227 : vector<2x16xf32>
    %236 = arith.addf %234, %235 : vector<2x16xf32>
    %237 = math.tanh %236 : vector<2x16xf32>
    %238 = arith.mulf %233, %237 : vector<2x16xf32>
    %239 = vector.extract_strided_slice %10 {offsets = [0, 0, 0], sizes = [1, 2, 64], strides = [1, 1, 1]} : vector<8x2x64xf32> to vector<1x2x64xf32>
    %240 = vector.shape_cast %239 : vector<1x2x64xf32> to vector<2x64xf32>
    %241 = vector.extract_strided_slice %10 {offsets = [7, 0, 0], sizes = [1, 2, 64], strides = [1, 1, 1]} : vector<8x2x64xf32> to vector<1x2x64xf32>
    %242 = vector.shape_cast %241 : vector<1x2x64xf32> to vector<2x64xf32>
    %243 = arith.select %0, %240, %242 : vector<2x64xf32>
    %cst_41 = arith.constant dense<0.000000e+00> : vector<2x64xf32>
    %244 = tpu.matmul %238, %12, %cst_41 {dimension_numbers = #tpu.dot_dimension_numbers<[1], [0], [0], [1], [0, 0, 1, 1], [], []>} : vector<2x16xf32>, vector<16x64xf32>, vector<2x64xf32> -> vector<2x64xf32>
    %245 = arith.addf %243, %244 : vector<2x64xf32>
    %246 = vector.extract_strided_slice %245 {offsets = [0, 0], sizes = [2, 16], strides = [1, 1]} : vector<2x64xf32> to vector<2x16xf32>
    %247 = arith.negf %246 : vector<2x16xf32>
    %248 = math.exp %247 : vector<2x16xf32>
    %cst_42 = arith.constant 1.000000e+00 : f32
    %249 = vector.broadcast %cst_42 : f32 to vector<2x16xf32>
    %250 = arith.addf %249, %248 : vector<2x16xf32>
    %251 = arith.divf %249, %250 : vector<2x16xf32>
    %252 = vector.extract_strided_slice %245 {offsets = [0, 16], sizes = [2, 16], strides = [1, 1]} : vector<2x64xf32> to vector<2x16xf32>
    %253 = arith.negf %252 : vector<2x16xf32>
    %254 = math.exp %253 : vector<2x16xf32>
    %cst_43 = arith.constant 1.000000e+00 : f32
    %255 = vector.broadcast %cst_43 : f32 to vector<2x16xf32>
    %256 = arith.addf %255, %254 : vector<2x16xf32>
    %257 = arith.divf %255, %256 : vector<2x16xf32>
    %258 = vector.extract_strided_slice %245 {offsets = [0, 32], sizes = [2, 16], strides = [1, 1]} : vector<2x64xf32> to vector<2x16xf32>
    %259 = math.tanh %258 : vector<2x16xf32>
    %260 = vector.extract_strided_slice %245 {offsets = [0, 48], sizes = [2, 16], strides = [1, 1]} : vector<2x64xf32> to vector<2x16xf32>
    %261 = arith.negf %260 : vector<2x16xf32>
    %262 = math.exp %261 : vector<2x16xf32>
    %cst_44 = arith.constant 1.000000e+00 : f32
    %263 = vector.broadcast %cst_44 : f32 to vector<2x16xf32>
    %264 = arith.addf %263, %262 : vector<2x16xf32>
    %265 = arith.divf %263, %264 : vector<2x16xf32>
    %266 = arith.mulf %257, %236 : vector<2x16xf32>
    %267 = arith.mulf %251, %259 : vector<2x16xf32>
    %268 = arith.addf %266, %267 : vector<2x16xf32>
    %269 = math.tanh %268 : vector<2x16xf32>
    %270 = arith.mulf %265, %269 : vector<2x16xf32>
    %271 = arith.select %0, %270, %46 : vector<2x16xf32>
    %272 = arith.select %0, %238, %78 : vector<2x16xf32>
    %273 = arith.select %0, %206, %110 : vector<2x16xf32>
    %274 = arith.select %0, %174, %142 : vector<2x16xf32>
    %275 = arith.select %0, %142, %174 : vector<2x16xf32>
    %276 = arith.select %0, %110, %206 : vector<2x16xf32>
    %277 = arith.select %0, %78, %238 : vector<2x16xf32>
    %278 = arith.select %0, %46, %270 : vector<2x16xf32>
    %279 = vector.shape_cast %271 : vector<2x16xf32> to vector<1x2x16xf32>
    %280 = vector.shape_cast %272 : vector<2x16xf32> to vector<1x2x16xf32>
    %281 = vector.shape_cast %273 : vector<2x16xf32> to vector<1x2x16xf32>
    %282 = vector.shape_cast %274 : vector<2x16xf32> to vector<1x2x16xf32>
    %283 = vector.shape_cast %275 : vector<2x16xf32> to vector<1x2x16xf32>
    %284 = vector.shape_cast %276 : vector<2x16xf32> to vector<1x2x16xf32>
    %285 = vector.shape_cast %277 : vector<2x16xf32> to vector<1x2x16xf32>
    %286 = vector.shape_cast %278 : vector<2x16xf32> to vector<1x2x16xf32>
    %287 = tpu.concatenate %279, %280, %281, %282, %283, %284, %285, %286 in 0 : vector<1x2x16xf32>, vector<1x2x16xf32>, vector<1x2x16xf32>, vector<1x2x16xf32>, vector<1x2x16xf32>, vector<1x2x16xf32>, vector<1x2x16xf32>, vector<1x2x16xf32> -> vector<8x2x16xf32>
    %c0_45 = arith.constant 0 : index
    %c0_46 = arith.constant 0 : index
    %c0_47 = arith.constant 0 : index
    %c0_48 = arith.constant 0 : index
    %288 = vector.load %arg5[%c0_45, %c0_46, %c0_47, %c0_48] : memref<1x8x2x16xf32, #tpu.memory_space<vmem>>, vector<1x8x2x16xf32>
    %289 = vector.shape_cast %288 : vector<1x8x2x16xf32> to vector<8x2x16xf32>
    %290 = vector.shape_cast %287 : vector<8x2x16xf32> to vector<1x8x2x16xf32>
    tpu.vector_store %arg5[%c0_45, %c0_46, %c0_47, %c0_48], %290 {strides = array<i32>} : memref<1x8x2x16xf32, #tpu.memory_space<vmem>>, vector<1x8x2x16xf32>,
    return
  }
  func.func @transform_0(%arg0: i32) -> (i32, i32, i32) {
    %c0_i32 = arith.constant 0 : i32
    %c0_i32_0 = arith.constant 0 : i32
    %c0_i32_1 = arith.constant 0 : i32
    %c0_i32_2 = arith.constant 0 : i32
    return %c0_i32, %c0_i32_0, %c0_i32_1 : i32, i32, i32
  }
  func.func @transform_1(%arg0: i32) -> (i32, i32, i32) {
    %c0_i32 = arith.constant 0 : i32
    %c0_i32_0 = arith.constant 0 : i32
    %c0_i32_1 = arith.constant 0 : i32
    return %arg0, %c0_i32, %c0_i32_0 : i32, i32, i32
  }
  func.func @transform_2(%arg0: i32) -> (i32, i32, i32) {
    %c0_i32 = arith.constant 0 : i32
    %c0_i32_0 = arith.constant 0 : i32
    %c0_i32_1 = arith.constant 0 : i32
    return %arg0, %c0_i32, %c0_i32_0 : i32, i32, i32
  }
  func.func @transform_3(%arg0: i32) -> (i32, i32, i32) {
    %c0_i32 = arith.constant 0 : i32
    %c0_i32_0 = arith.constant 0 : i32
    %c0_i32_1 = arith.constant 0 : i32
    return %arg0, %c0_i32, %c0_i32_0 : i32, i32, i32
  }
  func.func @transform_4(%arg0: i32) -> (i32, i32, i32, i32) {
    %c0_i32 = arith.constant 0 : i32
    %c0_i32_0 = arith.constant 0 : i32
    %c0_i32_1 = arith.constant 0 : i32
    %c0_i32_2 = arith.constant 0 : i32
    return %arg0, %c0_i32, %c0_i32_0, %c0_i32_1 : i32, i32, i32, i32
  }
}

</mosaic_0001>

<llo_original>
// kernel: tpu_custom_call.1
$region0: #{tpu_custom_call.1}
  #allocation0 [shape = 'u32[]', space=smem, size = 0x4, offset = 0x4, fixed_abs, tag = 'smem constant byte address 0x4 - core index']
  #allocation1 [shape = 'u32[144,128]{1,0:T(1,128)}', space=vmem, size = 0x12000, scoped, tag = 'internal scratch']
  %s0 = inlined_call_operand.hbm [shape: f32[8,2,16], index: 0, kind: input, shape index: {}]
  %s1 = inlined_call_operand.hbm [shape: f32[2,16,64], index: 1, kind: input, shape index: {}]
  %s2 = inlined_call_operand.hbm [shape: f32[2,16,64], index: 2, kind: input, shape index: {}]
  %s3 = inlined_call_operand.vmem [shape: f32[2,1,64], index: 3, kind: input, shape index: {}]
  %s4 = inlined_call_operand.hbm [shape: f32[2,8,2,16], index: 4, kind: output, shape index: {}]
  %s5 = sld [smem:[#allocation0]]
  $region61: #{tpu_custom_call.1} parent=0
    _
  %s7 = ssub.s32 1, %s5
  %s8 = scalar_select 0, %s7, %s5
  $region1: #{tpu_custom_call.1} parent=0
    #allocation2 [shape = 'u8[8192]{0}', space=vmem, size = 0x2000, scoped, tag = 'input window, operand 0, single buffered']
    #allocation3 [shape = 's32[2]{0}', space=sflag, size = 0x8, scoped, tag = 'scoped memory for tpu_custom_call.1']
    #allocation4 [shape = 's32[2]{0}', space=sflag, size = 0x8, scoped, tag = 'scoped memory for tpu_custom_call.1']
    #allocation5 [shape = 'u8[16384]{0}', space=vmem, size = 0x4000, scoped, tag = 'input window, operand 1']
    #allocation6 [shape = 's32[2]{0}', space=sflag, size = 0x8, scoped, tag = 'scoped memory for tpu_custom_call.1']
    #allocation7 [shape = 'u8[16384]{0}', space=vmem, size = 0x4000, scoped, tag = 'input window, operand 2']
    #allocation8 [shape = 'u8[16384]{0}', space=vmem, size = 0x4000, scoped, tag = 'output window, operand 0']
    %9 = vsyncpa [#allocation3], 0
    %10 = vsyncpa [#allocation6], 0
    %s11 = scalar_lea.sflag [#allocation6], 1
    %12 = vsyncpa %s11, 0
    %13 = vsyncpa [#allocation4], 0
    %s14 = scalar_lea.sflag [#allocation4], 1
    %15 = vsyncpa %s14, 0
    loop: start=0, step=1, limit=4
    $region2: #{tpu_custom_call.1} parent=1 // loop_pre_header
      _
    $region3: #{tpu_custom_call.1} parent=1 // loop_header
      %s17 = sphi 0, %s21
      %p18 = scmp.ge.s32.totalorder %s17, 4
      %s25 = sphi 0, %s25
      %s27 = sphi 0, %s25
      %s28 = sphi 0, %s27
      %s42 = sphi 0, %s28
      %s48 = sphi 0, %s50
      %s51 = sphi 0, %s48
      %s52 = sphi 0, %s51
      %s68 = sphi 0, %s52
      %s74 = sphi 0, %s76
      %s77 = sphi 0, %s74
      %s78 = sphi 0, %s77
      %s94 = sphi 0, %s78
      %s100 = sphi 0, %s102
      %s103 = sphi 0, %s100
      %s104 = sphi 0, %s103
      %s120 = sphi 0, %s104
      %s126 = sphi 0, %s128
      %s129 = sphi 0, %s126
      %s130 = sphi 0, %s129
      %s146 = sphi 0, %s130
    $region4: #{tpu_custom_call.1} parent=1 // loop_header_branch
      %20 = sbr.rel (%p18) target = $region8
    $region5: #{tpu_custom_call.1} parent=1 // loop_body
      %s22 = ssub.s32 %s17, 1
      %s23 = ssub.s32 %s17, 2
      %s24 = sadd.s32 %s17, 1
      %s26 = sadd.s32 %s25, 1
      %p29 = scmp.eq.s32.totalorder %s17, 1
      %p30 = scmp.ne.s32.totalorder %s25, %s27
      %p31 = scmp.eq.s32.totalorder %s17, 0
      %p32 = por %p30, %p31
      %p33 = scmp.ne.s32.totalorder %s25, %s27
      %p34 = scmp.eq.s32.totalorder %s22, 1
      %p35 = por %p33, %p34
      %p36 = scmp.ne.s32.totalorder %s27, %s28
      %p37 = scmp.eq.s32.totalorder %s22, 0
      %p38 = por %p36, %p37
      %p39 = scmp.ne.s32.totalorder %s27, %s28
      %p40 = scmp.eq.s32.totalorder %s23, 1
      %p41 = por %p39, %p40
      %p43 = scmp.ne.s32.totalorder %s28, %s42
      %p44 = scmp.eq.s32.totalorder %s23, 0
      %p45 = por %p43, %p44
      %s46 = ssub.s32 %s17, %s24
      %p47 = scmp.eq.s32.totalorder %s46, 0
      %s49 = sadd.s32 %s48, 1
      %s50 = scalar_select %p47, %s48, %s49
      %p53 = pneg %p47
      %p54 = scmp.eq.s32.totalorder %s17, 1
      %p55 = por %p53, %p54
      %p56 = scmp.ne.s32.totalorder %s48, %s51
      %p57 = scmp.eq.s32.totalorder %s17, 0
      %p58 = por %p56, %p57
      %p59 = scmp.ne.s32.totalorder %s48, %s51
      %p60 = scmp.eq.s32.totalorder %s22, 1
      %p61 = por %p59, %p60
      %p62 = scmp.ne.s32.totalorder %s51, %s52
      %p63 = scmp.eq.s32.totalorder %s22, 0
      %p64 = por %p62, %p63
      %p65 = scmp.ne.s32.totalorder %s51, %s52
      %p66 = scmp.eq.s32.totalorder %s23, 1
      %p67 = por %p65, %p66
      %p69 = scmp.ne.s32.totalorder %s52, %s68
      %p70 = scmp.eq.s32.totalorder %s23, 0
      %p71 = por %p69, %p70
      %s72 = ssub.s32 %s17, %s24
      %p73 = scmp.eq.s32.totalorder %s72, 0
      %s75 = sadd.s32 %s74, 1
      %s76 = scalar_select %p73, %s74, %s75
      %p79 = pneg %p73
      %p80 = scmp.eq.s32.totalorder %s17, 1
      %p81 = por %p79, %p80
      %p82 = scmp.ne.s32.totalorder %s74, %s77
      %p83 = scmp.eq.s32.totalorder %s17, 0
      %p84 = por %p82, %p83
      %p85 = scmp.ne.s32.totalorder %s74, %s77
      %p86 = scmp.eq.s32.totalorder %s22, 1
      %p87 = por %p85, %p86
      %p88 = scmp.ne.s32.totalorder %s77, %s78
      %p89 = scmp.eq.s32.totalorder %s22, 0
      %p90 = por %p88, %p89
      %p91 = scmp.ne.s32.totalorder %s77, %s78
      %p92 = scmp.eq.s32.totalorder %s23, 1
      %p93 = por %p91, %p92
      %p95 = scmp.ne.s32.totalorder %s78, %s94
      %p96 = scmp.eq.s32.totalorder %s23, 0
      %p97 = por %p95, %p96
      %s98 = ssub.s32 %s17, %s24
      %p99 = scmp.eq.s32.totalorder %s98, 0
      %s101 = sadd.s32 %s100, 1
      %s102 = scalar_select %p99, %s100, %s101
      %p105 = pneg %p99
      %p106 = scmp.eq.s32.totalorder %s17, 1
      %p107 = por %p105, %p106
      %p108 = scmp.ne.s32.totalorder %s100, %s103
      %p109 = scmp.eq.s32.totalorder %s17, 0
      %p110 = por %p108, %p109
      %p111 = scmp.ne.s32.totalorder %s100, %s103
      %p112 = scmp.eq.s32.totalorder %s22, 1
      %p113 = por %p111, %p112
      %p114 = scmp.ne.s32.totalorder %s103, %s104
      %p115 = scmp.eq.s32.totalorder %s22, 0
      %p116 = por %p114, %p115
      %p117 = scmp.ne.s32.totalorder %s103, %s104
      %p118 = scmp.eq.s32.totalorder %s23, 1
      %p119 = por %p117, %p118
      %p121 = scmp.ne.s32.totalorder %s104, %s120
      %p122 = scmp.eq.s32.totalorder %s23, 0
      %p123 = por %p121, %p122
      %s124 = ssub.s32 %s17, %s24
      %p125 = scmp.eq.s32.totalorder %s124, 0
      %s127 = sadd.s32 %s126, 1
      %s128 = scalar_select %p125, %s126, %s127
      %p131 = pneg %p125
      %p132 = scmp.eq.s32.totalorder %s17, 1
      %p133 = por %p131, %p132
      %p134 = scmp.ne.s32.totalorder %s126, %s129
      %p135 = scmp.eq.s32.totalorder %s17, 0
      %p136 = por %p134, %p135
      %p137 = scmp.ne.s32.totalorder %s126, %s129
      %p138 = scmp.eq.s32.totalorder %s22, 1
      %p139 = por %p137, %p138
      %p140 = scmp.ne.s32.totalorder %s129, %s130
      %p141 = scmp.eq.s32.totalorder %s22, 0
      %p142 = por %p140, %p141
      %p143 = scmp.ne.s32.totalorder %s129, %s130
      %p144 = scmp.eq.s32.totalorder %s23, 1
      %p145 = por %p143, %p144
      %p147 = scmp.ne.s32.totalorder %s130, %s146
      %p148 = scmp.eq.s32.totalorder %s23, 0
      %p149 = por %p147, %p148
      %p150 = scmp.le.s32.totalorder 1, %s17
      %p151 = scmp.lt.s32.totalorder %s17, 3
      %p152 = pnand %p150, %p151
      %p153 = pneg %p152
      // Predicated region
      $region9: #{tpu_custom_call.1} parent=5 // pred_check
        _
      $region10: #{tpu_custom_call.1} parent=5 // pred_check_branch
        %155 = sbr.rel (%p152) target = $region12
      $region11: #{tpu_custom_call.1} parent=5 // pred_region
        %s156 = ssub.s32 %s17, 1
        // Predicated region
        $region13: #{tpu_custom_call.1} parent=11 // pred_check
          %p157 = pneg %p38
        $region14: #{tpu_custom_call.1} parent=11 // pred_check_branch
          %159 = sbr.rel (%p157) target = $region16
        $region15: #{tpu_custom_call.1} parent=11 // pred_region
          %s161 = ssub.s32 256, 256
          %162 = vsyncadd [#allocation3], %s161
          %s163 = sshll.u32 [#allocation2], 4
          %s164 = int_to_ptr.vmem [resolvable:$true] %s163
          %169 = dma.hbm_to_vmem [thread:$0]  %s0, 256, %s164, [#allocation3], 32, 32, 2
        $region16: #{tpu_custom_call.1} parent=11 // pred_fallthru
          _
      $region12: #{tpu_custom_call.1} parent=5 // pred_fallthru
        _
      %p170 = scmp.lt.s32.totalorder %s17, 2
      // Predicated region
      $region17: #{tpu_custom_call.1} parent=5 // pred_check
        %p171 = pneg %p170
      $region18: #{tpu_custom_call.1} parent=5 // pred_check_branch
        %173 = sbr.rel (%p171) target = $region20
      $region19: #{tpu_custom_call.1} parent=5 // pred_region
        // Predicated region
        $region21: #{tpu_custom_call.1} parent=19 // pred_check
          %p174 = pneg %p58
        $region22: #{tpu_custom_call.1} parent=19 // pred_check_branch
          %176 = sbr.rel (%p174) target = $region24
        $region23: #{tpu_custom_call.1} parent=19 // pred_region
          %s177 = sand.u32 %s17, 1
          %s178 = scalar_lea.sflag [#allocation6], %s177
          %s179 = sand.u32 %s48, 1
          %s180 = smul.addr %s179, 16
          %s181 = scalar_lea.vmem [#allocation5], %s180
          %s183 = ssub.s32 256, 256
          %184 = vsyncadd %s178, %s183
          %s185 = smul.addr %s17, 2
          %s186 = smul.addr %s185, 128
          %s187 = scalar_lea.hbm %s1, %s186
          %s188 = sshll.u32 %s181, 4
          %s189 = int_to_ptr.vmem [resolvable:$true] %s188
          %194 = dma.hbm_to_vmem [thread:$0]  %s187, 256, %s189, %s178, 128, 128, 8
        $region24: #{tpu_custom_call.1} parent=19 // pred_fallthru
          _
        // Predicated region
        $region25: #{tpu_custom_call.1} parent=19 // pred_check
          %p195 = pneg %p84
        $region26: #{tpu_custom_call.1} parent=19 // pred_check_branch
          %197 = sbr.rel (%p195) target = $region28
        $region27: #{tpu_custom_call.1} parent=19 // pred_region
          %s198 = sand.u32 %s17, 1
          %s199 = scalar_lea.sflag [#allocation6], %s198
          %s200 = sand.u32 %s74, 1
          %s201 = smul.addr %s200, 16
          %s202 = scalar_lea.vmem [#allocation7], %s201
          %s204 = ssub.s32 256, 256
          %205 = vsyncadd %s199, %s204
          %s206 = smul.addr %s17, 2
          %s207 = smul.addr %s206, 128
          %s208 = scalar_lea.hbm %s2, %s207
          %s209 = sshll.u32 %s202, 4
          %s210 = int_to_ptr.vmem [resolvable:$true] %s209
          %215 = dma.hbm_to_vmem [thread:$0]  %s208, 256, %s210, %s199, 128, 128, 8
        $region28: #{tpu_custom_call.1} parent=19 // pred_fallthru
          _
        // Predicated region
        $region29: #{tpu_custom_call.1} parent=19 // pred_check
          %p216 = pneg %p110
        $region30: #{tpu_custom_call.1} parent=19 // pred_check_branch
          %218 = sbr.rel (%p216) target = $region32
        $region31: #{tpu_custom_call.1} parent=19 // pred_region
          %p219 = scmp.lt.s32.totalorder %s17, 1
          %s220 = scalar_select %p219, %s17, 1
          %s221 = scalar_lea.vmem %s3, %s220
        $region32: #{tpu_custom_call.1} parent=19 // pred_fallthru
          _
      $region20: #{tpu_custom_call.1} parent=5 // pred_fallthru
        _
      %p222 = scmp.le.s32.totalorder 1, %s17
      %p223 = scmp.lt.s32.totalorder %s17, 3
      %p224 = pnand %p222, %p223
      %p225 = pneg %p224
      // Predicated region
      $region33: #{tpu_custom_call.1} parent=5 // pred_check
        _
      $region34: #{tpu_custom_call.1} parent=5 // pred_check_branch
        %227 = sbr.rel (%p224) target = $region36
      $region35: #{tpu_custom_call.1} parent=5 // pred_region
        %s228 = ssub.s32 %s17, 1
        // Predicated region
        $region37: #{tpu_custom_call.1} parent=35 // pred_check
          %p229 = pneg %p38
        $region38: #{tpu_custom_call.1} parent=35 // pred_check_branch
          %231 = sbr.rel (%p229) target = $region40
        $region39: #{tpu_custom_call.1} parent=35 // pred_region
          %232 = dma.done [#allocation3], 256
        $region40: #{tpu_custom_call.1} parent=35 // pred_fallthru
          _
        %s233 = sand.u32 %s22, 1
        %s234 = scalar_lea.sflag [#allocation6], %s233
        %s235 = sand.u32 %s51, 1
        %s236 = smul.addr %s235, 16
        %s237 = scalar_lea.vmem [#allocation5], %s236
        // Predicated region
        $region41: #{tpu_custom_call.1} parent=35 // pred_check
          %p238 = pneg %p64
        $region42: #{tpu_custom_call.1} parent=35 // pred_check_branch
          %240 = sbr.rel (%p238) target = $region44
        $region43: #{tpu_custom_call.1} parent=35 // pred_region
          %241 = dma.done %s234, 256
        $region44: #{tpu_custom_call.1} parent=35 // pred_fallthru
          _
        %s242 = sand.u32 %s22, 1
        %s243 = scalar_lea.sflag [#allocation6], %s242
        %s244 = sand.u32 %s77, 1
        %s245 = smul.addr %s244, 16
        %s246 = scalar_lea.vmem [#allocation7], %s245
        // Predicated region
        $region45: #{tpu_custom_call.1} parent=35 // pred_check
          %p247 = pneg %p90
        $region46: #{tpu_custom_call.1} parent=35 // pred_check_branch
          %249 = sbr.rel (%p247) target = $region48
        $region47: #{tpu_custom_call.1} parent=35 // pred_region
          %250 = dma.done %s243, 256
        $region48: #{tpu_custom_call.1} parent=35 // pred_fallthru
          _
        %p251 = pneg %p38
        %p252 = pneg %p35
        %s253 = sand.u32 %s22, 1
        %s254 = scalar_lea.sflag [#allocation6], %s253
        %s255 = sand.u32 %s51, 1
        %s256 = smul.addr %s255, 16
        %s257 = scalar_lea.vmem [#allocation5], %s256
        %p258 = pneg %p64
        %p259 = pneg %p61
        %s260 = sand.u32 %s22, 1
        %s261 = scalar_lea.sflag [#allocation6], %s260
        %s262 = sand.u32 %s77, 1
        %s263 = smul.addr %s262, 16
        %s264 = scalar_lea.vmem [#allocation7], %s263
        %p265 = pneg %p90
        %p266 = pneg %p87
        %p267 = scmp.lt.s32.totalorder %s22, 1
        %s268 = scalar_select %p267, %s22, 1
        %s269 = scalar_lea.vmem %s3, %s268
        %p270 = pneg %p116
        %p271 = pneg %p113
        %p272 = pneg %p142
        %p273 = pneg %p139
        %s274 = sand.u32 %s129, 1
        %s275 = scalar_lea.sflag [#allocation4], %s274
        %s276 = sand.u32 %s129, 1
        %s277 = smul.addr %s276, 16
        %s278 = scalar_lea.vmem [#allocation8], %s277
        %p279 = scmp.lt.s32.totalorder %s22, 1
        %s280 = scalar_select %p279, %s22, 1
        %s281 = scalar_lea.vmem %s3, %s280
        %p282 = scmp.eq.s32.totalorder %s22, 1
        %v283 = vld [vmem:[#allocation2] sm:$0x3]
        %v284 = vld [vmem:[#allocation2 + $0x2] sm:$0x3]
        %v285 = vld [vmem:[#allocation2 + $0x4] sm:$0x3]
        %v286 = vld [vmem:[#allocation2 + $0x6] sm:$0x3]
        %v287 = vld [vmem:[#allocation2 + $0x8] sm:$0x3]
        %v288 = vld [vmem:[#allocation2 + $0xa] sm:$0x3]
        %v289 = vld [vmem:[#allocation2 + $0xc] sm:$0x3]
        %v290 = vld [vmem:[#allocation2 + $0xe] sm:$0x3]
        %v291 = vld [vmem:[%s237] sm:$0xff]
        %v292 = vld [vmem:[%s237 + $0x8] sm:$0xff]
        %v293 = vld [vmem:[%s281] sm:$0x1]
        %v295 = vlaneseq
        %v296 = vshrl.u32 %v295, 7
        %v297 = vsub.s32 0, %v296
        %v298 = vrot.slane %v293, %v297
        %v308 = vcombine.low %v283, %v284
        %v309 = vcombine.low %v285, %v286
        %v311 = vunpack.c.l.s4 1983009808
        %v312 = vunpack.c.0.s8 %v311
        %v313 = vlaneseq
        %v314 = vshrl.u32 %v313, 7
        %v315 = vsub.s32 %v312, %v314
        %v316 = vrot.slane %v308, %v315
        %v318 = vunpack.c.l.s4 1983009808
        %v319 = vunpack.c.0.s8 %v318
        %v320 = vlaneseq
        %v321 = vshrl.u32 %v320, 7
        %v322 = vsub.s32 %v319, %v321
        %v323 = vrot.slane %v309, %v322
        %v324 = vcombine.low %v316, %v323
        %v325 = vcombine.low %v287, %v288
        %v326 = vcombine.low %v289, %v290
        %v328 = vunpack.c.l.s4 1983009808
        %v329 = vunpack.c.0.s8 %v328
        %v330 = vlaneseq
        %v331 = vshrl.u32 %v330, 7
        %v332 = vsub.s32 %v329, %v331
        %v333 = vrot.slane %v325, %v332
        %v335 = vunpack.c.l.s4 1983009808
        %v336 = vunpack.c.0.s8 %v335
        %v337 = vlaneseq
        %v338 = vshrl.u32 %v337, 7
        %v339 = vsub.s32 %v336, %v338
        %v340 = vrot.slane %v326, %v339
        %v341 = vcombine.low %v333, %v340
        %vm342 = vcmask 130048
        %v343 = vsel %vm342, %v324, 0
        %v345 = vsel %vm342, %v341, 0
        %347 = vmatprep.subr.mxu0 0.0
        %348 = vmatpush1.msra.mxu0 0.0
        %349 = vmatprep.subr.mxu0 0.0
        %350 = vmatpush1.msra.mxu0 0.0
        %351 = vmatprep.subr.mxu0 0.0
        %352 = vmatpush1.msra.mxu0 0.0
        %353 = vmatprep.subr.mxu0 0.0
        %354 = vmatpush1.msra.mxu0 0.0
        %355 = vmatprep.subr.mxu0 0.0
        %356 = vmatpush1.msra.mxu0 0.0
        %357 = vmatprep.subr.mxu0 0.0
        %358 = vmatpush1.msra.mxu0 0.0
        %359 = vmatprep.subr.mxu0 0.0
        %360 = vmatpush1.msra.mxu0 0.0
        %361 = vmatprep.subr.mxu0 0.0
        %362 = vmatpush1.msra.mxu0 0.0
        %363 = vmatprep.subr.mxu0 0.0
        %364 = vmatpush1.msra.mxu0 0.0
        %365 = vmatprep.subr.mxu0 0.0
        %366 = vmatpush1.msra.mxu0 0.0
        %367 = vmatprep.subr.mxu0 0.0
        %368 = vmatpush1.msra.mxu0 0.0
        %369 = vmatprep.subr.mxu0 0.0
        %370 = vmatpush1.msra.mxu0 0.0
        %371 = vmatprep.subr.mxu0 0.0
        %372 = vmatpush1.msra.mxu0 0.0
        %373 = vmatprep.subr.mxu0 0.0
        %374 = vmatpush1.msra.mxu0 0.0
        %375 = vmatprep.subr.mxu0 0.0
        %376 = vmatpush1.msra.mxu0 %v292
        %377 = vmatprep.subr.mxu0 0.0
        %378 = vmatpush1.msra.mxu0 %v291
        %379 = vmatprep.subr.mxu0 0.0
        %380 = vmatpush2.msra.mxu0 0.0
        %381 = vmatprep.subr.mxu0 0.0
        %382 = vmatpush2.msra.mxu0 0.0
        %383 = vmatprep.subr.mxu0 0.0
        %384 = vmatpush2.msra.mxu0 0.0
        %385 = vmatprep.subr.mxu0 0.0
        %386 = vmatpush2.msra.mxu0 0.0
        %387 = vmatprep.subr.mxu0 0.0
        %388 = vmatpush2.msra.mxu0 0.0
        %389 = vmatprep.subr.mxu0 0.0
        %390 = vmatpush2.msra.mxu0 0.0
        %391 = vmatprep.subr.mxu0 0.0
        %392 = vmatpush2.msra.mxu0 0.0
        %393 = vmatprep.subr.mxu0 0.0
        %394 = vmatpush2.msra.mxu0 0.0
        %395 = vmatprep.subr.mxu0 0.0
        %396 = vmatpush2.msra.mxu0 0.0
        %397 = vmatprep.subr.mxu0 0.0
        %398 = vmatpush2.msra.mxu0 0.0
        %399 = vmatprep.subr.mxu0 0.0
        %400 = vmatpush2.msra.mxu0 0.0
        %401 = vmatprep.subr.mxu0 0.0
        %402 = vmatpush2.msra.mxu0 0.0
        %403 = vmatprep.subr.mxu0 0.0
        %404 = vmatpush2.msra.mxu0 0.0
        %405 = vmatprep.subr.mxu0 0.0
        %406 = vmatpush2.msra.mxu0 0.0
        %407 = vmatprep.subr.mxu0 0.0
        %408 = vmatpush2.msra.mxu0 0.0
        %409 = vmatprep.subr.mxu0 0.0
        %410 = vmatpush2.msra.mxu0 0.0
        %411 = vmatprep.mubr.f32.mxu0 0.0
        %412 = vmatmul.mubr.f32.gmra.mxu0 %v343
        %v413 = vpop.f32.mrf.mxu0
        %v414 = vadd.f32 %v298, %v413
        %v415 = vpop.f32.mrf.mxu0
        %416 = vmatprep.mubr.f32.mxu0 0.0
        %417 = vmatmul.mubr.f32.gmra.mxu0 %v345
        %v418 = vpop.f32.mrf.mxu0
        %v419 = vadd.f32 %v298, %v418
        %v420 = vpop.f32.mrf.mxu0
        %421 = vdwg.mxu0
        %v424 = vcombine.high %v414, %v414
        %v426 = vunpack.c.l.s4 1983009808
        %v427 = vunpack.c.0.s8 %v426
        %v428 = vlaneseq
        %v429 = vshrl.u32 %v428, 7
        %v430 = vsub.s32 %v427, %v429
        %v431 = vrot.slane %v414, %v430
        %v433 = vunpack.c.l.s4 1983009808
        %v434 = vunpack.c.0.s8 %v433
        %v435 = vlaneseq
        %v436 = vshrl.u32 %v435, 7
        %v437 = vsub.s32 %v434, %v436
        %v438 = vrot.slane %v424, %v437
        %v439 = vcombine.high %v431, %v431
        %v440 = vcombine.high %v438, %v438
        %v441 = vcombine.high %v419, %v419
        %v443 = vunpack.c.l.s4 1983009808
        %v444 = vunpack.c.0.s8 %v443
        %v445 = vlaneseq
        %v446 = vshrl.u32 %v445, 7
        %v447 = vsub.s32 %v444, %v446
        %v448 = vrot.slane %v419, %v447
        %v450 = vunpack.c.l.s4 1983009808
        %v451 = vunpack.c.0.s8 %v450
        %v452 = vlaneseq
        %v453 = vshrl.u32 %v452, 7
        %v454 = vsub.s32 %v451, %v453
        %v455 = vrot.slane %v441, %v454
        %v456 = vcombine.high %v448, %v448
        %v457 = vcombine.high %v455, %v455
        %v466 = vld [vmem:[%s246] sm:$0xff]
        %v467 = vld [vmem:[%s246 + $0x8] sm:$0xff]
        %s468 = scalar_select %p282, 1, 0
        %v469 = vstv %s468
        %vm470 = vcmp.eq.s32.totalorder %v469, 1
        %v471 = vsel %vm470, %v457, %v431
        %v473 = vsel %vm342, 0.0, 0
        %475 = vmatprep.subr.mxu0 0.0
        %476 = vmatpush1.msra.mxu0 0.0
        %477 = vmatprep.subr.mxu0 0.0
        %478 = vmatpush1.msra.mxu0 0.0
        %479 = vmatprep.subr.mxu0 0.0
        %480 = vmatpush1.msra.mxu0 0.0
        %481 = vmatprep.subr.mxu0 0.0
        %482 = vmatpush1.msra.mxu0 0.0
        %483 = vmatprep.subr.mxu0 0.0
        %484 = vmatpush1.msra.mxu0 0.0
        %485 = vmatprep.subr.mxu0 0.0
        %486 = vmatpush1.msra.mxu0 0.0
        %487 = vmatprep.subr.mxu0 0.0
        %488 = vmatpush1.msra.mxu0 0.0
        %489 = vmatprep.subr.mxu0 0.0
        %490 = vmatpush1.msra.mxu0 0.0
        %491 = vmatprep.subr.mxu0 0.0
        %492 = vmatpush1.msra.mxu0 0.0
        %493 = vmatprep.subr.mxu0 0.0
        %494 = vmatpush1.msra.mxu0 0.0
        %495 = vmatprep.subr.mxu0 0.0
        %496 = vmatpush1.msra.mxu0 0.0
        %497 = vmatprep.subr.mxu0 0.0
        %498 = vmatpush1.msra.mxu0 0.0
        %499 = vmatprep.subr.mxu0 0.0
        %500 = vmatpush1.msra.mxu0 0.0
        %501 = vmatprep.subr.mxu0 0.0
        %502 = vmatpush1.msra.mxu0 0.0
        %503 = vmatprep.subr.mxu0 0.0
        %504 = vmatpush1.msra.mxu0 %v467
        %505 = vmatprep.subr.mxu0 0.0
        %506 = vmatpush1.msra.mxu0 %v466
        %507 = vmatprep.subr.mxu0 0.0
        %508 = vmatpush2.msra.mxu0 0.0
        %509 = vmatprep.subr.mxu0 0.0
        %510 = vmatpush2.msra.mxu0 0.0
        %511 = vmatprep.subr.mxu0 0.0
        %512 = vmatpush2.msra.mxu0 0.0
        %513 = vmatprep.subr.mxu0 0.0
        %514 = vmatpush2.msra.mxu0 0.0
        %515 = vmatprep.subr.mxu0 0.0
        %516 = vmatpush2.msra.mxu0 0.0
        %517 = vmatprep.subr.mxu0 0.0
        %518 = vmatpush2.msra.mxu0 0.0
        %519 = vmatprep.subr.mxu0 0.0
        %520 = vmatpush2.msra.mxu0 0.0
        %521 = vmatprep.subr.mxu0 0.0
        %522 = vmatpush2.msra.mxu0 0.0
        %523 = vmatprep.subr.mxu0 0.0
        %524 = vmatpush2.msra.mxu0 0.0
        %525 = vmatprep.subr.mxu0 0.0
        %526 = vmatpush2.msra.mxu0 0.0
        %527 = vmatprep.subr.mxu0 0.0
        %528 = vmatpush2.msra.mxu0 0.0
        %529 = vmatprep.subr.mxu0 0.0
        %530 = vmatpush2.msra.mxu0 0.0
        %531 = vmatprep.subr.mxu0 0.0
        %532 = vmatpush2.msra.mxu0 0.0
        %533 = vmatprep.subr.mxu0 0.0
        %534 = vmatpush2.msra.mxu0 0.0
        %535 = vmatprep.subr.mxu0 0.0
        %536 = vmatpush2.msra.mxu0 0.0
        %537 = vmatprep.subr.mxu0 0.0
        %538 = vmatpush2.msra.mxu0 0.0
        %539 = vmatprep.mubr.f32.mxu0 0.0
        %540 = vmatmul.mubr.f32.gmra.mxu0 %v473
        %v541 = vpop.f32.mrf.mxu0
        %v542 = vadd.f32 0.0, %v541
        %v543 = vpop.f32.mrf.mxu0
        %544 = vdwg.mxu0
        %v545 = vadd.f32 %v471, %v542
        %v546 = vxor.u32 %v545, 2147483648
        %v547 = vmul.f32 %v546, 1.442695
        %v548 = vpow.pop %v547
        %v549 = vadd.f32 %v548, 1.0
        %v550 = vrcp.pop %v549
        %v551 = vmul.f32 1.0, %v550
        %v552 = vtanh.pop %v545
        %v553 = vmul.f32 %v551, 0.0
        %555 = vrot.lane.b32.xlu0 %v552, 96
        %v556 = vpop.permute.xlu0 %555
        %v558 = vmul.f32 %v551, %v556
        %560 = vrot.lane.b32.xlu0 %v558, 16
        %v561 = vpop.permute.xlu0 %560
        %v563 = vadd.f32 %v553, %v561
        %v564 = vtanh.pop %v563
        %566 = vrot.lane.b32.xlu0 %v564, 32
        %v567 = vpop.permute.xlu0 %566
        %v569 = vmul.f32 %v551, %v567
        %v570 = vsel %vm470, %v455, %v439
        %v573 = vunpack.c.l.s4 1983009808
        %v574 = vunpack.c.0.s8 %v573
        %v575 = vlaneseq
        %v576 = vshrl.u32 %v575, 7
        %v577 = vsub.s32 %v574, %v576
        %v578 = vrot.slane %v569, %v577
        %579 = vrot.lane.b32.xlu0 %v578, 80
        %v580 = vpop.permute.xlu0 %579
        %v581 = vsel %vm342, %v580, 0
        %583 = vmatprep.subr.mxu0 0.0
        %584 = vmatpush1.msra.mxu0 0.0
        %585 = vmatprep.subr.mxu0 0.0
        %586 = vmatpush1.msra.mxu0 0.0
        %587 = vmatprep.subr.mxu0 0.0
        %588 = vmatpush1.msra.mxu0 0.0
        %589 = vmatprep.subr.mxu0 0.0
        %590 = vmatpush1.msra.mxu0 0.0
        %591 = vmatprep.subr.mxu0 0.0
        %592 = vmatpush1.msra.mxu0 0.0
        %593 = vmatprep.subr.mxu0 0.0
        %594 = vmatpush1.msra.mxu0 0.0
        %595 = vmatprep.subr.mxu0 0.0
        %596 = vmatpush1.msra.mxu0 0.0
        %597 = vmatprep.subr.mxu0 0.0
        %598 = vmatpush1.msra.mxu0 0.0
        %599 = vmatprep.subr.mxu0 0.0
        %600 = vmatpush1.msra.mxu0 0.0
        %601 = vmatprep.subr.mxu0 0.0
        %602 = vmatpush1.msra.mxu0 0.0
        %603 = vmatprep.subr.mxu0 0.0
        %604 = vmatpush1.msra.mxu0 0.0
        %605 = vmatprep.subr.mxu0 0.0
        %606 = vmatpush1.msra.mxu0 0.0
        %607 = vmatprep.subr.mxu0 0.0
        %608 = vmatpush1.msra.mxu0 0.0
        %609 = vmatprep.subr.mxu0 0.0
        %610 = vmatpush1.msra.mxu0 0.0
        %611 = vmatprep.subr.mxu0 0.0
        %612 = vmatpush1.msra.mxu0 %v467
        %613 = vmatprep.subr.mxu0 0.0
        %614 = vmatpush1.msra.mxu0 %v466
        %615 = vmatprep.subr.mxu0 0.0
        %616 = vmatpush2.msra.mxu0 0.0
        %617 = vmatprep.subr.mxu0 0.0
        %618 = vmatpush2.msra.mxu0 0.0
        %619 = vmatprep.subr.mxu0 0.0
        %620 = vmatpush2.msra.mxu0 0.0
        %621 = vmatprep.subr.mxu0 0.0
        %622 = vmatpush2.msra.mxu0 0.0
        %623 = vmatprep.subr.mxu0 0.0
        %624 = vmatpush2.msra.mxu0 0.0
        %625 = vmatprep.subr.mxu0 0.0
        %626 = vmatpush2.msra.mxu0 0.0
        %627 = vmatprep.subr.mxu0 0.0
        %628 = vmatpush2.msra.mxu0 0.0
        %629 = vmatprep.subr.mxu0 0.0
        %630 = vmatpush2.msra.mxu0 0.0
        %631 = vmatprep.subr.mxu0 0.0
        %632 = vmatpush2.msra.mxu0 0.0
        %633 = vmatprep.subr.mxu0 0.0
        %634 = vmatpush2.msra.mxu0 0.0
        %635 = vmatprep.subr.mxu0 0.0
        %636 = vmatpush2.msra.mxu0 0.0
        %637 = vmatprep.subr.mxu0 0.0
        %638 = vmatpush2.msra.mxu0 0.0
        %639 = vmatprep.subr.mxu0 0.0
        %640 = vmatpush2.msra.mxu0 0.0
        %641 = vmatprep.subr.mxu0 0.0
        %642 = vmatpush2.msra.mxu0 0.0
        %643 = vmatprep.subr.mxu0 0.0
        %644 = vmatpush2.msra.mxu0 0.0
        %645 = vmatprep.subr.mxu0 0.0
        %646 = vmatpush2.msra.mxu0 0.0
        %647 = vmatprep.mubr.f32.mxu0 0.0
        %648 = vmatmul.mubr.f32.gmra.mxu0 %v581
        %v649 = vpop.f32.mrf.mxu0
        %v650 = vadd.f32 0.0, %v649
        %v651 = vpop.f32.mrf.mxu0
        %652 = vdwg.mxu0
        %v653 = vadd.f32 %v570, %v650
        %v654 = vxor.u32 %v653, 2147483648
        %v655 = vmul.f32 %v654, 1.442695
        %v656 = vpow.pop %v655
        %v657 = vadd.f32 %v656, 1.0
        %v658 = vrcp.pop %v657
        %v659 = vmul.f32 1.0, %v658
        %v660 = vtanh.pop %v653
        %v661 = vmul.f32 %v659, %v563
        %663 = vrot.lane.b32.xlu0 %v660, 96
        %v664 = vpop.permute.xlu0 %663
        %v666 = vmul.f32 %v659, %v664
        %668 = vrot.lane.b32.xlu0 %v666, 16
        %v669 = vpop.permute.xlu0 %668
        %v671 = vadd.f32 %v661, %v669
        %v672 = vtanh.pop %v671
        %674 = vrot.lane.b32.xlu0 %v672, 32
        %v675 = vpop.permute.xlu0 %674
        %v677 = vmul.f32 %v659, %v675
        %v678 = vsel %vm470, %v456, %v438
        %v681 = vunpack.c.l.s4 1983009808
        %v682 = vunpack.c.0.s8 %v681
        %v683 = vlaneseq
        %v684 = vshrl.u32 %v683, 7
        %v685 = vsub.s32 %v682, %v684
        %v686 = vrot.slane %v677, %v685
        %687 = vrot.lane.b32.xlu0 %v686, 80
        %v688 = vpop.permute.xlu0 %687
        %v689 = vsel %vm342, %v688, 0
        %691 = vmatprep.subr.mxu0 0.0
        %692 = vmatpush1.msra.mxu0 0.0
        %693 = vmatprep.subr.mxu0 0.0
        %694 = vmatpush1.msra.mxu0 0.0
        %695 = vmatprep.subr.mxu0 0.0
        %696 = vmatpush1.msra.mxu0 0.0
        %697 = vmatprep.subr.mxu0 0.0
        %698 = vmatpush1.msra.mxu0 0.0
        %699 = vmatprep.subr.mxu0 0.0
        %700 = vmatpush1.msra.mxu0 0.0
        %701 = vmatprep.subr.mxu0 0.0
        %702 = vmatpush1.msra.mxu0 0.0
        %703 = vmatprep.subr.mxu0 0.0
        %704 = vmatpush1.msra.mxu0 0.0
        %705 = vmatprep.subr.mxu0 0.0
        %706 = vmatpush1.msra.mxu0 0.0
        %707 = vmatprep.subr.mxu0 0.0
        %708 = vmatpush1.msra.mxu0 0.0
        %709 = vmatprep.subr.mxu0 0.0
        %710 = vmatpush1.msra.mxu0 0.0
        %711 = vmatprep.subr.mxu0 0.0
        %712 = vmatpush1.msra.mxu0 0.0
        %713 = vmatprep.subr.mxu0 0.0
        %714 = vmatpush1.msra.mxu0 0.0
        %715 = vmatprep.subr.mxu0 0.0
        %716 = vmatpush1.msra.mxu0 0.0
        %717 = vmatprep.subr.mxu0 0.0
        %718 = vmatpush1.msra.mxu0 0.0
        %719 = vmatprep.subr.mxu0 0.0
        %720 = vmatpush1.msra.mxu0 %v467
        %721 = vmatprep.subr.mxu0 0.0
        %722 = vmatpush1.msra.mxu0 %v466
        %723 = vmatprep.subr.mxu0 0.0
        %724 = vmatpush2.msra.mxu0 0.0
        %725 = vmatprep.subr.mxu0 0.0
        %726 = vmatpush2.msra.mxu0 0.0
        %727 = vmatprep.subr.mxu0 0.0
        %728 = vmatpush2.msra.mxu0 0.0
        %729 = vmatprep.subr.mxu0 0.0
        %730 = vmatpush2.msra.mxu0 0.0
        %731 = vmatprep.subr.mxu0 0.0
        %732 = vmatpush2.msra.mxu0 0.0
        %733 = vmatprep.subr.mxu0 0.0
        %734 = vmatpush2.msra.mxu0 0.0
        %735 = vmatprep.subr.mxu0 0.0
        %736 = vmatpush2.msra.mxu0 0.0
        %737 = vmatprep.subr.mxu0 0.0
        %738 = vmatpush2.msra.mxu0 0.0
        %739 = vmatprep.subr.mxu0 0.0
        %740 = vmatpush2.msra.mxu0 0.0
        %741 = vmatprep.subr.mxu0 0.0
        %742 = vmatpush2.msra.mxu0 0.0
        %743 = vmatprep.subr.mxu0 0.0
        %744 = vmatpush2.msra.mxu0 0.0
        %745 = vmatprep.subr.mxu0 0.0
        %746 = vmatpush2.msra.mxu0 0.0
        %747 = vmatprep.subr.mxu0 0.0
        %748 = vmatpush2.msra.mxu0 0.0
        %749 = vmatprep.subr.mxu0 0.0
        %750 = vmatpush2.msra.mxu0 0.0
        %751 = vmatprep.subr.mxu0 0.0
        %752 = vmatpush2.msra.mxu0 0.0
        %753 = vmatprep.subr.mxu0 0.0
        %754 = vmatpush2.msra.mxu0 0.0
        %755 = vmatprep.mubr.f32.mxu0 0.0
        %756 = vmatmul.mubr.f32.gmra.mxu0 %v689
        %v757 = vpop.f32.mrf.mxu0
        %v758 = vadd.f32 0.0, %v757
        %v759 = vpop.f32.mrf.mxu0
        %760 = vdwg.mxu0
        %v761 = vadd.f32 %v678, %v758
        %v762 = vxor.u32 %v761, 2147483648
        %v763 = vmul.f32 %v762, 1.442695
        %v764 = vpow.pop %v763
        %v765 = vadd.f32 %v764, 1.0
        %v766 = vrcp.pop %v765
        %v767 = vmul.f32 1.0, %v766
        %v768 = vtanh.pop %v761
        %v769 = vmul.f32 %v767, %v671
        %771 = vrot.lane.b32.xlu0 %v768, 96
        %v772 = vpop.permute.xlu0 %771
        %v774 = vmul.f32 %v767, %v772
        %776 = vrot.lane.b32.xlu0 %v774, 16
        %v777 = vpop.permute.xlu0 %776
        %v779 = vadd.f32 %v769, %v777
        %v780 = vtanh.pop %v779
        %782 = vrot.lane.b32.xlu0 %v780, 32
        %v783 = vpop.permute.xlu0 %782
        %v785 = vmul.f32 %v767, %v783
        %v786 = vsel %vm470, %v448, %v440
        %v789 = vunpack.c.l.s4 1983009808
        %v790 = vunpack.c.0.s8 %v789
        %v791 = vlaneseq
        %v792 = vshrl.u32 %v791, 7
        %v793 = vsub.s32 %v790, %v792
        %v794 = vrot.slane %v785, %v793
        %795 = vrot.lane.b32.xlu0 %v794, 80
        %v796 = vpop.permute.xlu0 %795
        %v797 = vsel %vm342, %v796, 0
        %799 = vmatprep.subr.mxu0 0.0
        %800 = vmatpush1.msra.mxu0 0.0
        %801 = vmatprep.subr.mxu0 0.0
        %802 = vmatpush1.msra.mxu0 0.0
        %803 = vmatprep.subr.mxu0 0.0
        %804 = vmatpush1.msra.mxu0 0.0
        %805 = vmatprep.subr.mxu0 0.0
        %806 = vmatpush1.msra.mxu0 0.0
        %807 = vmatprep.subr.mxu0 0.0
        %808 = vmatpush1.msra.mxu0 0.0
        %809 = vmatprep.subr.mxu0 0.0
        %810 = vmatpush1.msra.mxu0 0.0
        %811 = vmatprep.subr.mxu0 0.0
        %812 = vmatpush1.msra.mxu0 0.0
        %813 = vmatprep.subr.mxu0 0.0
        %814 = vmatpush1.msra.mxu0 0.0
        %815 = vmatprep.subr.mxu0 0.0
        %816 = vmatpush1.msra.mxu0 0.0
        %817 = vmatprep.subr.mxu0 0.0
        %818 = vmatpush1.msra.mxu0 0.0
        %819 = vmatprep.subr.mxu0 0.0
        %820 = vmatpush1.msra.mxu0 0.0
        %821 = vmatprep.subr.mxu0 0.0
        %822 = vmatpush1.msra.mxu0 0.0
        %823 = vmatprep.subr.mxu0 0.0
        %824 = vmatpush1.msra.mxu0 0.0
        %825 = vmatprep.subr.mxu0 0.0
        %826 = vmatpush1.msra.mxu0 0.0
        %827 = vmatprep.subr.mxu0 0.0
        %828 = vmatpush1.msra.mxu0 %v467
        %829 = vmatprep.subr.mxu0 0.0
        %830 = vmatpush1.msra.mxu0 %v466
        %831 = vmatprep.subr.mxu0 0.0
        %832 = vmatpush2.msra.mxu0 0.0
        %833 = vmatprep.subr.mxu0 0.0
        %834 = vmatpush2.msra.mxu0 0.0
        %835 = vmatprep.subr.mxu0 0.0
        %836 = vmatpush2.msra.mxu0 0.0
        %837 = vmatprep.subr.mxu0 0.0
        %838 = vmatpush2.msra.mxu0 0.0
        %839 = vmatprep.subr.mxu0 0.0
        %840 = vmatpush2.msra.mxu0 0.0
        %841 = vmatprep.subr.mxu0 0.0
        %842 = vmatpush2.msra.mxu0 0.0
        %843 = vmatprep.subr.mxu0 0.0
        %844 = vmatpush2.msra.mxu0 0.0
        %845 = vmatprep.subr.mxu0 0.0
        %846 = vmatpush2.msra.mxu0 0.0
        %847 = vmatprep.subr.mxu0 0.0
        %848 = vmatpush2.msra.mxu0 0.0
        %849 = vmatprep.subr.mxu0 0.0
        %850 = vmatpush2.msra.mxu0 0.0
        %851 = vmatprep.subr.mxu0 0.0
        %852 = vmatpush2.msra.mxu0 0.0
        %853 = vmatprep.subr.mxu0 0.0
        %854 = vmatpush2.msra.mxu0 0.0
        %855 = vmatprep.subr.mxu0 0.0
        %856 = vmatpush2.msra.mxu0 0.0
        %857 = vmatprep.subr.mxu0 0.0
        %858 = vmatpush2.msra.mxu0 0.0
        %859 = vmatprep.subr.mxu0 0.0
        %860 = vmatpush2.msra.mxu0 0.0
        %861 = vmatprep.subr.mxu0 0.0
        %862 = vmatpush2.msra.mxu0 0.0
        %863 = vmatprep.mubr.f32.mxu0 0.0
        %864 = vmatmul.mubr.f32.gmra.mxu0 %v797
        %v865 = vpop.f32.mrf.mxu0
        %v866 = vadd.f32 0.0, %v865
        %v867 = vpop.f32.mrf.mxu0
        %868 = vdwg.mxu0
        %v869 = vadd.f32 %v786, %v866
        %v870 = vxor.u32 %v869, 2147483648
        %v871 = vmul.f32 %v870, 1.442695
        %v872 = vpow.pop %v871
        %v873 = vadd.f32 %v872, 1.0
        %v874 = vrcp.pop %v873
        %v875 = vmul.f32 1.0, %v874
        %v876 = vtanh.pop %v869
        %v877 = vmul.f32 %v875, %v779
        %879 = vrot.lane.b32.xlu0 %v876, 96
        %v880 = vpop.permute.xlu0 %879
        %v882 = vmul.f32 %v875, %v880
        %884 = vrot.lane.b32.xlu0 %v882, 16
        %v885 = vpop.permute.xlu0 %884
        %v887 = vadd.f32 %v877, %v885
        %v888 = vtanh.pop %v887
        %890 = vrot.lane.b32.xlu0 %v888, 32
        %v891 = vpop.permute.xlu0 %890
        %v893 = vmul.f32 %v875, %v891
        %v894 = vsel %vm470, %v440, %v448
        %v897 = vunpack.c.l.s4 1983009808
        %v898 = vunpack.c.0.s8 %v897
        %v899 = vlaneseq
        %v900 = vshrl.u32 %v899, 7
        %v901 = vsub.s32 %v898, %v900
        %v902 = vrot.slane %v893, %v901
        %903 = vrot.lane.b32.xlu0 %v902, 80
        %v904 = vpop.permute.xlu0 %903
        %v905 = vsel %vm342, %v904, 0
        %907 = vmatprep.subr.mxu0 0.0
        %908 = vmatpush1.msra.mxu0 0.0
        %909 = vmatprep.subr.mxu0 0.0
        %910 = vmatpush1.msra.mxu0 0.0
        %911 = vmatprep.subr.mxu0 0.0
        %912 = vmatpush1.msra.mxu0 0.0
        %913 = vmatprep.subr.mxu0 0.0
        %914 = vmatpush1.msra.mxu0 0.0
        %915 = vmatprep.subr.mxu0 0.0
        %916 = vmatpush1.msra.mxu0 0.0
        %917 = vmatprep.subr.mxu0 0.0
        %918 = vmatpush1.msra.mxu0 0.0
        %919 = vmatprep.subr.mxu0 0.0
        %920 = vmatpush1.msra.mxu0 0.0
        %921 = vmatprep.subr.mxu0 0.0
        %922 = vmatpush1.msra.mxu0 0.0
        %923 = vmatprep.subr.mxu0 0.0
        %924 = vmatpush1.msra.mxu0 0.0
        %925 = vmatprep.subr.mxu0 0.0
        %926 = vmatpush1.msra.mxu0 0.0
        %927 = vmatprep.subr.mxu0 0.0
        %928 = vmatpush1.msra.mxu0 0.0
        %929 = vmatprep.subr.mxu0 0.0
        %930 = vmatpush1.msra.mxu0 0.0
        %931 = vmatprep.subr.mxu0 0.0
        %932 = vmatpush1.msra.mxu0 0.0
        %933 = vmatprep.subr.mxu0 0.0
        %934 = vmatpush1.msra.mxu0 0.0
        %935 = vmatprep.subr.mxu0 0.0
        %936 = vmatpush1.msra.mxu0 %v467
        %937 = vmatprep.subr.mxu0 0.0
        %938 = vmatpush1.msra.mxu0 %v466
        %939 = vmatprep.subr.mxu0 0.0
        %940 = vmatpush2.msra.mxu0 0.0
        %941 = vmatprep.subr.mxu0 0.0
        %942 = vmatpush2.msra.mxu0 0.0
        %943 = vmatprep.subr.mxu0 0.0
        %944 = vmatpush2.msra.mxu0 0.0
        %945 = vmatprep.subr.mxu0 0.0
        %946 = vmatpush2.msra.mxu0 0.0
        %947 = vmatprep.subr.mxu0 0.0
        %948 = vmatpush2.msra.mxu0 0.0
        %949 = vmatprep.subr.mxu0 0.0
        %950 = vmatpush2.msra.mxu0 0.0
        %951 = vmatprep.subr.mxu0 0.0
        %952 = vmatpush2.msra.mxu0 0.0
        %953 = vmatprep.subr.mxu0 0.0
        %954 = vmatpush2.msra.mxu0 0.0
        %955 = vmatprep.subr.mxu0 0.0
        %956 = vmatpush2.msra.mxu0 0.0
        %957 = vmatprep.subr.mxu0 0.0
        %958 = vmatpush2.msra.mxu0 0.0
        %959 = vmatprep.subr.mxu0 0.0
        %960 = vmatpush2.msra.mxu0 0.0
        %961 = vmatprep.subr.mxu0 0.0
        %962 = vmatpush2.msra.mxu0 0.0
        %963 = vmatprep.subr.mxu0 0.0
        %964 = vmatpush2.msra.mxu0 0.0
        %965 = vmatprep.subr.mxu0 0.0
        %966 = vmatpush2.msra.mxu0 0.0
        %967 = vmatprep.subr.mxu0 0.0
        %968 = vmatpush2.msra.mxu0 0.0
        %969 = vmatprep.subr.mxu0 0.0
        %970 = vmatpush2.msra.mxu0 0.0
        %971 = vmatprep.mubr.f32.mxu0 0.0
        %972 = vmatmul.mubr.f32.gmra.mxu0 %v905
        %v973 = vpop.f32.mrf.mxu0
        %v974 = vadd.f32 0.0, %v973
        %v975 = vpop.f32.mrf.mxu0
        %976 = vdwg.mxu0
        %v977 = vadd.f32 %v894, %v974
        %v978 = vxor.u32 %v977, 2147483648
        %v979 = vmul.f32 %v978, 1.442695
        %v980 = vpow.pop %v979
        %v981 = vadd.f32 %v980, 1.0
        %v982 = vrcp.pop %v981
        %v983 = vmul.f32 1.0, %v982
        %v984 = vtanh.pop %v977
        %v985 = vmul.f32 %v983, %v887
        %987 = vrot.lane.b32.xlu0 %v984, 96
        %v988 = vpop.permute.xlu0 %987
        %v990 = vmul.f32 %v983, %v988
        %992 = vrot.lane.b32.xlu0 %v990, 16
        %v993 = vpop.permute.xlu0 %992
        %v995 = vadd.f32 %v985, %v993
        %v996 = vtanh.pop %v995
        %998 = vrot.lane.b32.xlu0 %v996, 32
        %v999 = vpop.permute.xlu0 %998
        %v1001 = vmul.f32 %v983, %v999
        %v1002 = vsel %vm470, %v438, %v456
        %v1005 = vunpack.c.l.s4 1983009808
        %v1006 = vunpack.c.0.s8 %v1005
        %v1007 = vlaneseq
        %v1008 = vshrl.u32 %v1007, 7
        %v1009 = vsub.s32 %v1006, %v1008
        %v1010 = vrot.slane %v1001, %v1009
        %1011 = vrot.lane.b32.xlu0 %v1010, 80
        %v1012 = vpop.permute.xlu0 %1011
        %v1013 = vsel %vm342, %v1012, 0
        %1015 = vmatprep.subr.mxu0 0.0
        %1016 = vmatpush1.msra.mxu0 0.0
        %1017 = vmatprep.subr.mxu0 0.0
        %1018 = vmatpush1.msra.mxu0 0.0
        %1019 = vmatprep.subr.mxu0 0.0
        %1020 = vmatpush1.msra.mxu0 0.0
        %1021 = vmatprep.subr.mxu0 0.0
        %1022 = vmatpush1.msra.mxu0 0.0
        %1023 = vmatprep.subr.mxu0 0.0
        %1024 = vmatpush1.msra.mxu0 0.0
        %1025 = vmatprep.subr.mxu0 0.0
        %1026 = vmatpush1.msra.mxu0 0.0
        %1027 = vmatprep.subr.mxu0 0.0
        %1028 = vmatpush1.msra.mxu0 0.0
        %1029 = vmatprep.subr.mxu0 0.0
        %1030 = vmatpush1.msra.mxu0 0.0
        %1031 = vmatprep.subr.mxu0 0.0
        %1032 = vmatpush1.msra.mxu0 0.0
        %1033 = vmatprep.subr.mxu0 0.0
        %1034 = vmatpush1.msra.mxu0 0.0
        %1035 = vmatprep.subr.mxu0 0.0
        %1036 = vmatpush1.msra.mxu0 0.0
        %1037 = vmatprep.subr.mxu0 0.0
        %1038 = vmatpush1.msra.mxu0 0.0
        %1039 = vmatprep.subr.mxu0 0.0
        %1040 = vmatpush1.msra.mxu0 0.0
        %1041 = vmatprep.subr.mxu0 0.0
        %1042 = vmatpush1.msra.mxu0 0.0
        %1043 = vmatprep.subr.mxu0 0.0
        %1044 = vmatpush1.msra.mxu0 %v467
        %1045 = vmatprep.subr.mxu0 0.0
        %1046 = vmatpush1.msra.mxu0 %v466
        %1047 = vmatprep.subr.mxu0 0.0
        %1048 = vmatpush2.msra.mxu0 0.0
        %1049 = vmatprep.subr.mxu0 0.0
        %1050 = vmatpush2.msra.mxu0 0.0
        %1051 = vmatprep.subr.mxu0 0.0
        %1052 = vmatpush2.msra.mxu0 0.0
        %1053 = vmatprep.subr.mxu0 0.0
        %1054 = vmatpush2.msra.mxu0 0.0
        %1055 = vmatprep.subr.mxu0 0.0
        %1056 = vmatpush2.msra.mxu0 0.0
        %1057 = vmatprep.subr.mxu0 0.0
        %1058 = vmatpush2.msra.mxu0 0.0
        %1059 = vmatprep.subr.mxu0 0.0
        %1060 = vmatpush2.msra.mxu0 0.0
        %1061 = vmatprep.subr.mxu0 0.0
        %1062 = vmatpush2.msra.mxu0 0.0
        %1063 = vmatprep.subr.mxu0 0.0
        %1064 = vmatpush2.msra.mxu0 0.0
        %1065 = vmatprep.subr.mxu0 0.0
        %1066 = vmatpush2.msra.mxu0 0.0
        %1067 = vmatprep.subr.mxu0 0.0
        %1068 = vmatpush2.msra.mxu0 0.0
        %1069 = vmatprep.subr.mxu0 0.0
        %1070 = vmatpush2.msra.mxu0 0.0
        %1071 = vmatprep.subr.mxu0 0.0
        %1072 = vmatpush2.msra.mxu0 0.0
        %1073 = vmatprep.subr.mxu0 0.0
        %1074 = vmatpush2.msra.mxu0 0.0
        %1075 = vmatprep.subr.mxu0 0.0
        %1076 = vmatpush2.msra.mxu0 0.0
        %1077 = vmatprep.subr.mxu0 0.0
        %1078 = vmatpush2.msra.mxu0 0.0
        %1079 = vmatprep.mubr.f32.mxu0 0.0
        %1080 = vmatmul.mubr.f32.gmra.mxu0 %v1013
        %v1081 = vpop.f32.mrf.mxu0
        %v1082 = vadd.f32 0.0, %v1081
        %v1083 = vpop.f32.mrf.mxu0
        %1084 = vdwg.mxu0
        %v1085 = vadd.f32 %v1002, %v1082
        %v1086 = vxor.u32 %v1085, 2147483648
        %v1087 = vmul.f32 %v1086, 1.442695
        %v1088 = vpow.pop %v1087
        %v1089 = vadd.f32 %v1088, 1.0
        %v1090 = vrcp.pop %v1089
        %v1091 = vmul.f32 1.0, %v1090
        %v1092 = vtanh.pop %v1085
        %v1093 = vmul.f32 %v1091, %v995
        %1095 = vrot.lane.b32.xlu0 %v1092, 96
        %v1096 = vpop.permute.xlu0 %1095
        %v1098 = vmul.f32 %v1091, %v1096
        %1100 = vrot.lane.b32.xlu0 %v1098, 16
        %v1101 = vpop.permute.xlu0 %1100
        %v1103 = vadd.f32 %v1093, %v1101
        %v1104 = vtanh.pop %v1103
        %1106 = vrot.lane.b32.xlu0 %v1104, 32
        %v1107 = vpop.permute.xlu0 %1106
        %v1109 = vmul.f32 %v1091, %v1107
        %v1110 = vsel %vm470, %v439, %v455
        %v1113 = vunpack.c.l.s4 1983009808
        %v1114 = vunpack.c.0.s8 %v1113
        %v1115 = vlaneseq
        %v1116 = vshrl.u32 %v1115, 7
        %v1117 = vsub.s32 %v1114, %v1116
        %v1118 = vrot.slane %v1109, %v1117
        %1119 = vrot.lane.b32.xlu0 %v1118, 80
        %v1120 = vpop.permute.xlu0 %1119
        %v1121 = vsel %vm342, %v1120, 0
        %1123 = vmatprep.subr.mxu0 0.0
        %1124 = vmatpush1.msra.mxu0 0.0
        %1125 = vmatprep.subr.mxu0 0.0
        %1126 = vmatpush1.msra.mxu0 0.0
        %1127 = vmatprep.subr.mxu0 0.0
        %1128 = vmatpush1.msra.mxu0 0.0
        %1129 = vmatprep.subr.mxu0 0.0
        %1130 = vmatpush1.msra.mxu0 0.0
        %1131 = vmatprep.subr.mxu0 0.0
        %1132 = vmatpush1.msra.mxu0 0.0
        %1133 = vmatprep.subr.mxu0 0.0
        %1134 = vmatpush1.msra.mxu0 0.0
        %1135 = vmatprep.subr.mxu0 0.0
        %1136 = vmatpush1.msra.mxu0 0.0
        %1137 = vmatprep.subr.mxu0 0.0
        %1138 = vmatpush1.msra.mxu0 0.0
        %1139 = vmatprep.subr.mxu0 0.0
        %1140 = vmatpush1.msra.mxu0 0.0
        %1141 = vmatprep.subr.mxu0 0.0
        %1142 = vmatpush1.msra.mxu0 0.0
        %1143 = vmatprep.subr.mxu0 0.0
        %1144 = vmatpush1.msra.mxu0 0.0
        %1145 = vmatprep.subr.mxu0 0.0
        %1146 = vmatpush1.msra.mxu0 0.0
        %1147 = vmatprep.subr.mxu0 0.0
        %1148 = vmatpush1.msra.mxu0 0.0
        %1149 = vmatprep.subr.mxu0 0.0
        %1150 = vmatpush1.msra.mxu0 0.0
        %1151 = vmatprep.subr.mxu0 0.0
        %1152 = vmatpush1.msra.mxu0 %v467
        %1153 = vmatprep.subr.mxu0 0.0
        %1154 = vmatpush1.msra.mxu0 %v466
        %1155 = vmatprep.subr.mxu0 0.0
        %1156 = vmatpush2.msra.mxu0 0.0
        %1157 = vmatprep.subr.mxu0 0.0
        %1158 = vmatpush2.msra.mxu0 0.0
        %1159 = vmatprep.subr.mxu0 0.0
        %1160 = vmatpush2.msra.mxu0 0.0
        %1161 = vmatprep.subr.mxu0 0.0
        %1162 = vmatpush2.msra.mxu0 0.0
        %1163 = vmatprep.subr.mxu0 0.0
        %1164 = vmatpush2.msra.mxu0 0.0
        %1165 = vmatprep.subr.mxu0 0.0
        %1166 = vmatpush2.msra.mxu0 0.0
        %1167 = vmatprep.subr.mxu0 0.0
        %1168 = vmatpush2.msra.mxu0 0.0
        %1169 = vmatprep.subr.mxu0 0.0
        %1170 = vmatpush2.msra.mxu0 0.0
        %1171 = vmatprep.subr.mxu0 0.0
        %1172 = vmatpush2.msra.mxu0 0.0
        %1173 = vmatprep.subr.mxu0 0.0
        %1174 = vmatpush2.msra.mxu0 0.0
        %1175 = vmatprep.subr.mxu0 0.0
        %1176 = vmatpush2.msra.mxu0 0.0
        %1177 = vmatprep.subr.mxu0 0.0
        %1178 = vmatpush2.msra.mxu0 0.0
        %1179 = vmatprep.subr.mxu0 0.0
        %1180 = vmatpush2.msra.mxu0 0.0
        %1181 = vmatprep.subr.mxu0 0.0
        %1182 = vmatpush2.msra.mxu0 0.0
        %1183 = vmatprep.subr.mxu0 0.0
        %1184 = vmatpush2.msra.mxu0 0.0
        %1185 = vmatprep.subr.mxu0 0.0
        %1186 = vmatpush2.msra.mxu0 0.0
        %1187 = vmatprep.mubr.f32.mxu0 0.0
        %1188 = vmatmul.mubr.f32.gmra.mxu0 %v1121
        %v1189 = vpop.f32.mrf.mxu0
        %v1190 = vadd.f32 0.0, %v1189
        %v1191 = vpop.f32.mrf.mxu0
        %1192 = vdwg.mxu0
        %v1193 = vadd.f32 %v1110, %v1190
        %v1194 = vxor.u32 %v1193, 2147483648
        %v1195 = vmul.f32 %v1194, 1.442695
        %v1196 = vpow.pop %v1195
        %v1197 = vadd.f32 %v1196, 1.0
        %v1198 = vrcp.pop %v1197
        %v1199 = vmul.f32 1.0, %v1198
        %v1200 = vtanh.pop %v1193
        %v1201 = vmul.f32 %v1199, %v1103
        %1203 = vrot.lane.b32.xlu0 %v1200, 96
        %v1204 = vpop.permute.xlu0 %1203
        %v1206 = vmul.f32 %v1199, %v1204
        %1208 = vrot.lane.b32.xlu0 %v1206, 16
        %v1209 = vpop.permute.xlu0 %1208
        %v1211 = vadd.f32 %v1201, %v1209
        %v1212 = vtanh.pop %v1211
        %1214 = vrot.lane.b32.xlu0 %v1212, 32
        %v1215 = vpop.permute.xlu0 %1214
        %v1217 = vmul.f32 %v1199, %v1215
        %v1218 = vsel %vm470, %v431, %v457
        %v1221 = vunpack.c.l.s4 1983009808
        %v1222 = vunpack.c.0.s8 %v1221
        %v1223 = vlaneseq
        %v1224 = vshrl.u32 %v1223, 7
        %v1225 = vsub.s32 %v1222, %v1224
        %v1226 = vrot.slane %v1217, %v1225
        %1227 = vrot.lane.b32.xlu0 %v1226, 80
        %v1228 = vpop.permute.xlu0 %1227
        %v1229 = vsel %vm342, %v1228, 0
        %1231 = vmatprep.subr.mxu0 0.0
        %1232 = vmatpush1.msra.mxu0 0.0
        %1233 = vmatprep.subr.mxu0 0.0
        %1234 = vmatpush1.msra.mxu0 0.0
        %1235 = vmatprep.subr.mxu0 0.0
        %1236 = vmatpush1.msra.mxu0 0.0
        %1237 = vmatprep.subr.mxu0 0.0
        %1238 = vmatpush1.msra.mxu0 0.0
        %1239 = vmatprep.subr.mxu0 0.0
        %1240 = vmatpush1.msra.mxu0 0.0
        %1241 = vmatprep.subr.mxu0 0.0
        %1242 = vmatpush1.msra.mxu0 0.0
        %1243 = vmatprep.subr.mxu0 0.0
        %1244 = vmatpush1.msra.mxu0 0.0
        %1245 = vmatprep.subr.mxu0 0.0
        %1246 = vmatpush1.msra.mxu0 0.0
        %1247 = vmatprep.subr.mxu0 0.0
        %1248 = vmatpush1.msra.mxu0 0.0
        %1249 = vmatprep.subr.mxu0 0.0
        %1250 = vmatpush1.msra.mxu0 0.0
        %1251 = vmatprep.subr.mxu0 0.0
        %1252 = vmatpush1.msra.mxu0 0.0
        %1253 = vmatprep.subr.mxu0 0.0
        %1254 = vmatpush1.msra.mxu0 0.0
        %1255 = vmatprep.subr.mxu0 0.0
        %1256 = vmatpush1.msra.mxu0 0.0
        %1257 = vmatprep.subr.mxu0 0.0
        %1258 = vmatpush1.msra.mxu0 0.0
        %1259 = vmatprep.subr.mxu0 0.0
        %1260 = vmatpush1.msra.mxu0 %v467
        %1261 = vmatprep.subr.mxu0 0.0
        %1262 = vmatpush1.msra.mxu0 %v466
        %1263 = vmatprep.subr.mxu0 0.0
        %1264 = vmatpush2.msra.mxu0 0.0
        %1265 = vmatprep.subr.mxu0 0.0
        %1266 = vmatpush2.msra.mxu0 0.0
        %1267 = vmatprep.subr.mxu0 0.0
        %1268 = vmatpush2.msra.mxu0 0.0
        %1269 = vmatprep.subr.mxu0 0.0
        %1270 = vmatpush2.msra.mxu0 0.0
        %1271 = vmatprep.subr.mxu0 0.0
        %1272 = vmatpush2.msra.mxu0 0.0
        %1273 = vmatprep.subr.mxu0 0.0
        %1274 = vmatpush2.msra.mxu0 0.0
        %1275 = vmatprep.subr.mxu0 0.0
        %1276 = vmatpush2.msra.mxu0 0.0
        %1277 = vmatprep.subr.mxu0 0.0
        %1278 = vmatpush2.msra.mxu0 0.0
        %1279 = vmatprep.subr.mxu0 0.0
        %1280 = vmatpush2.msra.mxu0 0.0
        %1281 = vmatprep.subr.mxu0 0.0
        %1282 = vmatpush2.msra.mxu0 0.0
        %1283 = vmatprep.subr.mxu0 0.0
        %1284 = vmatpush2.msra.mxu0 0.0
        %1285 = vmatprep.subr.mxu0 0.0
        %1286 = vmatpush2.msra.mxu0 0.0
        %1287 = vmatprep.subr.mxu0 0.0
        %1288 = vmatpush2.msra.mxu0 0.0
        %1289 = vmatprep.subr.mxu0 0.0
        %1290 = vmatpush2.msra.mxu0 0.0
        %1291 = vmatprep.subr.mxu0 0.0
        %1292 = vmatpush2.msra.mxu0 0.0
        %1293 = vmatprep.subr.mxu0 0.0
        %1294 = vmatpush2.msra.mxu0 0.0
        %1295 = vmatprep.mubr.f32.mxu0 0.0
        %1296 = vmatmul.mubr.f32.gmra.mxu0 %v1229
        %v1297 = vpop.f32.mrf.mxu0
        %v1298 = vadd.f32 0.0, %v1297
        %v1299 = vpop.f32.mrf.mxu0
        %1300 = vdwg.mxu0
        %v1301 = vadd.f32 %v1218, %v1298
        %v1302 = vxor.u32 %v1301, 2147483648
        %v1303 = vmul.f32 %v1302, 1.442695
        %v1304 = vpow.pop %v1303
        %v1305 = vadd.f32 %v1304, 1.0
        %v1306 = vrcp.pop %v1305
        %v1307 = vmul.f32 1.0, %v1306
        %v1308 = vtanh.pop %v1301
        %v1309 = vmul.f32 %v1307, %v1211
        %1311 = vrot.lane.b32.xlu0 %v1308, 96
        %v1312 = vpop.permute.xlu0 %1311
        %v1314 = vmul.f32 %v1307, %v1312
        %1316 = vrot.lane.b32.xlu0 %v1314, 16
        %v1317 = vpop.permute.xlu0 %1316
        %v1319 = vadd.f32 %v1309, %v1317
        %v1320 = vtanh.pop %v1319
        %1322 = vrot.lane.b32.xlu0 %v1320, 32
        %v1323 = vpop.permute.xlu0 %1322
        %v1325 = vmul.f32 %v1307, %v1323
        %v1326 = vsel %vm470, %v1325, %v569
        %v1327 = vsel %vm470, %v1217, %v677
        %v1328 = vsel %vm470, %v1109, %v785
        %v1329 = vsel %vm470, %v1001, %v893
        %v1330 = vsel %vm470, %v893, %v1001
        %v1331 = vsel %vm470, %v785, %v1109
        %v1332 = vsel %vm470, %v677, %v1217
        %v1333 = vsel %vm470, %v569, %v1325
        %v1343 = vunpack.c.l.s4 1983009808
        %v1344 = vunpack.c.0.s8 %v1343
        %v1345 = vlaneseq
        %v1346 = vshrl.u32 %v1345, 7
        %v1347 = vsub.s32 %v1344, %v1346
        %v1348 = vrot.slane %v1326, %v1347
        %v1350 = vunpack.c.l.s4 1983009808
        %v1351 = vunpack.c.0.s8 %v1350
        %v1352 = vlaneseq
        %v1353 = vshrl.u32 %v1352, 7
        %v1354 = vsub.s32 %v1351, %v1353
        %v1355 = vrot.slane %v1327, %v1354
        %v1357 = vunpack.c.l.s4 1983009808
        %v1358 = vunpack.c.0.s8 %v1357
        %v1359 = vlaneseq
        %v1360 = vshrl.u32 %v1359, 7
        %v1361 = vsub.s32 %v1358, %v1360
        %v1362 = vrot.slane %v1328, %v1361
        %v1364 = vunpack.c.l.s4 1983009808
        %v1365 = vunpack.c.0.s8 %v1364
        %v1366 = vlaneseq
        %v1367 = vshrl.u32 %v1366, 7
        %v1368 = vsub.s32 %v1365, %v1367
        %v1369 = vrot.slane %v1329, %v1368
        %v1371 = vunpack.c.l.s4 1983009808
        %v1372 = vunpack.c.0.s8 %v1371
        %v1373 = vlaneseq
        %v1374 = vshrl.u32 %v1373, 7
        %v1375 = vsub.s32 %v1372, %v1374
        %v1376 = vrot.slane %v1330, %v1375
        %v1378 = vunpack.c.l.s4 1983009808
        %v1379 = vunpack.c.0.s8 %v1378
        %v1380 = vlaneseq
        %v1381 = vshrl.u32 %v1380, 7
        %v1382 = vsub.s32 %v1379, %v1381
        %v1383 = vrot.slane %v1331, %v1382
        %v1385 = vunpack.c.l.s4 1983009808
        %v1386 = vunpack.c.0.s8 %v1385
        %v1387 = vlaneseq
        %v1388 = vshrl.u32 %v1387, 7
        %v1389 = vsub.s32 %v1386, %v1388
        %v1390 = vrot.slane %v1332, %v1389
        %v1392 = vunpack.c.l.s4 1983009808
        %v1393 = vunpack.c.0.s8 %v1392
        %v1394 = vlaneseq
        %v1395 = vshrl.u32 %v1394, 7
        %v1396 = vsub.s32 %v1393, %v1395
        %v1397 = vrot.slane %v1333, %v1396
        %1398 = vrot.lane.b32.xlu0 %v1348, 80
        %v1399 = vpop.permute.xlu0 %1398
        %1400 = vrot.lane.b32.xlu0 %v1355, 80
        %v1401 = vpop.permute.xlu0 %1400
        %1402 = vrot.lane.b32.xlu0 %v1362, 80
        %v1403 = vpop.permute.xlu0 %1402
        %1404 = vrot.lane.b32.xlu0 %v1369, 80
        %v1405 = vpop.permute.xlu0 %1404
        %1406 = vrot.lane.b32.xlu0 %v1376, 80
        %v1407 = vpop.permute.xlu0 %1406
        %1408 = vrot.lane.b32.xlu0 %v1383, 80
        %v1409 = vpop.permute.xlu0 %1408
        %1410 = vrot.lane.b32.xlu0 %v1390, 80
        %v1411 = vpop.permute.xlu0 %1410
        %1412 = vrot.lane.b32.xlu0 %v1397, 80
        %v1413 = vpop.permute.xlu0 %1412
        %vm1422 = vcmask 123904
        %1423 = vst.msk [vmem:[%s278] sm:$0x3] %vm1422, %v1399
        %1424 = vst.msk [vmem:[%s278 + $0x2] sm:$0x3] %vm1422, %v1401
        %1425 = vst.msk [vmem:[%s278 + $0x4] sm:$0x3] %vm1422, %v1403
        %1426 = vst.msk [vmem:[%s278 + $0x6] sm:$0x3] %vm1422, %v1405
        %1427 = vst.msk [vmem:[%s278 + $0x8] sm:$0x3] %vm1422, %v1407
        %1428 = vst.msk [vmem:[%s278 + $0xa] sm:$0x3] %vm1422, %v1409
        %1429 = vst.msk [vmem:[%s278 + $0xc] sm:$0x3] %vm1422, %v1411
        %1430 = vst.msk [vmem:[%s278 + $0xe] sm:$0x3] %vm1422, %v1413
        %s1431 = sand.u32 %s129, 1
        %s1432 = scalar_lea.sflag [#allocation4], %s1431
        %s1433 = sand.u32 %s129, 1
        %s1434 = smul.addr %s1433, 16
        %s1435 = scalar_lea.vmem [#allocation8], %s1434
        // Predicated region
        $region49: #{tpu_custom_call.1} parent=35 // pred_check
          %p1436 = pneg %p139
        $region50: #{tpu_custom_call.1} parent=35 // pred_check_branch
          %1438 = sbr.rel (%p1436) target = $region52
        $region51: #{tpu_custom_call.1} parent=35 // pred_region
          %s1440 = ssub.s32 256, 256
          %1441 = vsyncadd %s1432, %s1440
          %s1442 = smul.addr %s22, 8
          %s1443 = smul.addr %s1442, 32
          %s1444 = scalar_lea.hbm %s4, %s1443
          %s1445 = sshll.u32 %s1435, 4
          %s1446 = int_to_ptr.vmem [resolvable:$true] %s1445
          %1451 = dma.vmem_to_hbm [thread:$0]  %s1446, 256, %s1444, %s1432, 32, 32, 2
        $region52: #{tpu_custom_call.1} parent=35 // pred_fallthru
          _
      $region36: #{tpu_custom_call.1} parent=5 // pred_fallthru
        _
      %p1452 = scmp.le.s32.totalorder 2, %s17
      // Predicated region
      $region53: #{tpu_custom_call.1} parent=5 // pred_check
        %p1453 = pneg %p1452
      $region54: #{tpu_custom_call.1} parent=5 // pred_check_branch
        %1455 = sbr.rel (%p1453) target = $region56
      $region55: #{tpu_custom_call.1} parent=5 // pred_region
        %s1456 = ssub.s32 %s17, 2
        // Predicated region
        $region57: #{tpu_custom_call.1} parent=55 // pred_check
          %p1457 = pneg %p145
        $region58: #{tpu_custom_call.1} parent=55 // pred_check_branch
          %1459 = sbr.rel (%p1457) target = $region60
        $region59: #{tpu_custom_call.1} parent=55 // pred_region
          %s1460 = sand.u32 %s130, 1
          %s1461 = scalar_lea.sflag [#allocation4], %s1460
          %s1462 = sand.u32 %s130, 1
          %s1463 = smul.addr %s1462, 16
          %s1464 = scalar_lea.vmem [#allocation8], %s1463
          %1465 = dma.done %s1461, 256
        $region60: #{tpu_custom_call.1} parent=55 // pred_fallthru
          _
      $region56: #{tpu_custom_call.1} parent=5 // pred_fallthru
        _
    $region6: #{tpu_custom_call.1} parent=1 // loop_footer
      %s21 = sadd.s32 1, %s17
    $region7: #{tpu_custom_call.1} parent=1 // loop_footer_branch
      %16 = sbr.rel target = $region3
    $region8: #{tpu_custom_call.1} parent=1 // loop_exit
      _
    %1466 = vsyncpa [#allocation3], 1
    %s1467 = scalar_lea.sflag [#allocation3], 1
    %1468 = vsyncpa %s1467, 1
    %1469 = vsyncpa [#allocation6], 1
    %s1470 = scalar_lea.sflag [#allocation6], 1
    %1471 = vsyncpa %s1470, 1
    %1472 = vsyncpa [#allocation4], 1
    %s1473 = scalar_lea.sflag [#allocation4], 1
    %1474 = vsyncpa %s1473, 1

</llo_original>
